<compile_context>
chip_gen: v7x
topology: tpu7x:2x2x1
jax: 0.10.0
libtpu: 0.0.40
codegen_flags: <defaults>
</compile_context>

<pallas_src>
import functools

import jax
import jax.numpy as jnp
from jax.experimental import pallas as pl
from jax.experimental.pallas import tpu as pltpu


def _self_express_kernel(coef_ref, z_ref, out_ref, acc_ref, *, use_bf16_mxu):
    """One (row-tile i, contraction-tile k) step.

    coef_ref : (T, T)   coef[i*T:(i+1)*T, k*T:(k+1)*T]
    z_ref    : (T, D)   z[k*T:(k+1)*T, :]
    out_ref  : (8, 128) per-row-tile folded partial of 0.5*||diff||^2
    acc_ref  : (T, D)   f32 accumulator (VMEM scratch), resident across k
    """
    i = pl.program_id(0)
    k = pl.program_id(1)
    nk = pl.num_programs(1)

    @pl.when(k == 0)
    def _():
        acc_ref[...] = jnp.zeros_like(acc_ref)

    a = coef_ref[...]
    b = z_ref[...]
    if use_bf16_mxu:
        a = a.astype(jnp.bfloat16)
        b = b.astype(jnp.bfloat16)
    acc_ref[...] += jnp.dot(a, b, preferred_element_type=jnp.float32)

    # tm == tk, so the rhs block at k == i is exactly the z rows of this row
    # tile: fold the "- z" of the residual in right here (no second z input).
    @pl.when(k == i)
    def _():
        acc_ref[...] -= z_ref[...].astype(jnp.float32)

    @pl.when(k == nk - 1)
    def _():
        d = acc_ref[...]
        d2 = d * d
        tm, dd = d2.shape
        if tm % 8 == 0 and dd % 128 == 0:
            # Fold to vreg shape with pure per-position adds (no cross-lane).
            folded = d2.reshape(tm // 8, 8, dd // 128, 128).sum(axis=(0, 2))
        else:
            # Fallback: spread the scalar sum uniformly (exact: /1024 is a
            # power-of-two scale, re-summed outside).
            folded = jnp.broadcast_to(jnp.sum(d2) * (1.0 / 1024.0), (8, 128))
        out_ref[...] = 0.5 * folded


def _pick_tile(H: int, D: int, budget_bytes: int = 20 * 1024 * 1024) -> int:
    """Largest MXU-friendly tile that divides H and fits a conservative VMEM budget."""
    for t in (512, 256, 128):
        if H % t != 0:
            continue
        # double-buffered coef + z blocks, single accumulator, tiny output.
        vmem = 4 * (2 * t * t + 2 * t * D + t * D) + 2 * 8 * 128 * 4
        if vmem <= budget_bytes:
            return t
    if H % 128 == 0:
        return 128
    return H  # single-shot: whole-array blocks always satisfy layout rules


def self_express_loss(coef: jax.Array, z: jax.Array, *,
                      tile: int | None = None,
                      use_bf16_mxu: bool = False) -> jax.Array:
    """recon_loss = 0.5 * ||coef @ z - z||_F^2, computed in a Pallas kernel."""
    H, H2 = coef.shape
    Hz, D = z.shape
    assert H == H2 == Hz, "coef must be (H, H) and z must be (H, D)"

    if tile is None:
        tile = _pick_tile(H, D)
    assert H % tile == 0, "tile must divide n_hidden"
    assert tile == H or tile % 128 == 0, "tile must be H or a multiple of 128"

    num = H // tile
    grid = (num, num)  # (row tiles, contraction tiles); tm == tk == tile

    partials = pl.pallas_call(
        functools.partial(_self_express_kernel, use_bf16_mxu=use_bf16_mxu),
        out_shape=jax.ShapeDtypeStruct((num * 8, 128), jnp.float32),
        grid_spec=pltpu.PrefetchScalarGridSpec(
            num_scalar_prefetch=0,
            grid=grid,
            in_specs=[
                # coef tile for (row block i, contraction block k)
                pl.BlockSpec((tile, tile), lambda i, k: (i, k)),
                # z rhs block for contraction block k (also the residual rows
                # when k == i) — z is read from HBM exactly once.
                pl.BlockSpec((tile, D), lambda i, k: (k, 0)),
            ],
            # per-row-tile (8,128) partial; constant across k, written only at
            # the last k step -> one writeback per row tile.
            out_specs=pl.BlockSpec((8, 128), lambda i, k: (i, 0)),
            scratch_shapes=[pltpu.VMEM((tile, D), jnp.float32)],
        ),
        compiler_params=pltpu.CompilerParams(
            # row tiles are independent (megacore-shardable); k accumulates.
            dimension_semantics=("parallel", "arbitrary"),
        ),
    )(coef, z)

    # Tiny final reduction of the per-tile vreg-shaped partials.
    return jnp.sum(partials)


if __name__ == "__main__":
    key = jax.random.PRNGKey(0)
    k_coef, k_z, k_coef2, k_z2 = jax.random.split(key, 4)

    # --- Case 1: small problem (single-shot program, grid (1, 1)). ---
    H, D = 128, 256
    # Module __init__ uses zeros((H, H)); use a small deterministic random
    # coef so the matmul path is actually exercised.
    coef = 0.01 * jax.random.normal(k_coef, (H, H), dtype=jnp.float32)
    z = jax.random.normal(k_z, (H, D), dtype=jnp.float32)

    loss = jax.block_until_ready(self_express_loss(coef, z))
    ref = 0.5 * jnp.sum((coef @ z - z) ** 2)
    assert jnp.allclose(loss, ref, rtol=1e-5, atol=1e-3), (loss, ref)

    # --- Case 2: force the tiled path (grid (2, 2)) to exercise K-accumulation
    # and the in-place residual subtraction at k == i. ---
    H2_, D2_ = 256, 128
    coef2 = 0.01 * jax.random.normal(k_coef2, (H2_, H2_), dtype=jnp.float32)
    z2 = jax.random.normal(k_z2, (H2_, D2_), dtype=jnp.float32)

    loss2 = jax.block_until_ready(self_express_loss(coef2, z2, tile=128))
    ref2 = 0.5 * jnp.sum((coef2 @ z2 - z2) ** 2)
    assert jnp.allclose(loss2, ref2, rtol=1e-5, atol=1e-3), (loss2, ref2)

    print("KERNEL_OK")
</pallas_src>

<mosaic_0001>
module attributes {stable_mosaic.version = 11 : i64} {
  func.func @_self_express_kernel(%arg0: i32, %arg1: i32, %arg2: memref<128x128xf32, #tpu.memory_space<vmem>>, %arg3: memref<128x256xf32, #tpu.memory_space<vmem>>, %arg4: memref<8x128xf32, #tpu.memory_space<vmem>>, %arg5: memref<128x256xf32, #tpu.memory_space<vmem>>) attributes {dimension_semantics = [#tpu.dimension_semantics<parallel>, #tpu.dimension_semantics<arbitrary>], iteration_bounds = array<i64: 1, 1>, scalar_prefetch = 0 : i64, scratch_operands = 1 : i64, tpu.core_type = #tpu.core_type<tc>, window_params = [{transform_indices = @transform_0, window_bounds = array<i64: 128, 128>}, {transform_indices = @transform_1, window_bounds = array<i64: 128, 256>}, {transform_indices = @transform_2, window_bounds = array<i64: 8, 128>}]} {
    %c0_i32 = arith.constant 0 : i32
    %0 = arith.cmpi eq, %arg1, %c0_i32 : i32
    %1 = arith.extui %0 : i1 to i32
    %c0_i32_0 = arith.constant 0 : i32
    %2 = arith.cmpi ne, %1, %c0_i32_0 : i32
    scf.if %2 {
      %cst_11 = arith.constant 0.000000e+00 : f32
      %15 = vector.broadcast %cst_11 : f32 to vector<128x256xf32>
      %c0_12 = arith.constant 0 : index
      %c0_13 = arith.constant 0 : index
      %16 = vector.load %arg5[%c0_12, %c0_13] : memref<128x256xf32, #tpu.memory_space<vmem>>, vector<128x256xf32>
      tpu.vector_store %arg5[%c0_12, %c0_13], %15 {strides = array<i32>} : memref<128x256xf32, #tpu.memory_space<vmem>>, vector<128x256xf32>,
    } else {
    }
    %c0 = arith.constant 0 : index
    %c0_1 = arith.constant 0 : index
    %3 = vector.load %arg2[%c0, %c0_1] : memref<128x128xf32, #tpu.memory_space<vmem>>, vector<128x128xf32>
    %c0_2 = arith.constant 0 : index
    %c0_3 = arith.constant 0 : index
    %4 = vector.load %arg3[%c0_2, %c0_3] : memref<128x256xf32, #tpu.memory_space<vmem>>, vector<128x256xf32>
    %c0_4 = arith.constant 0 : index
    %c0_5 = arith.constant 0 : index
    %5 = vector.load %arg5[%c0_4, %c0_5] : memref<128x256xf32, #tpu.memory_space<vmem>>, vector<128x256xf32>
    %cst = arith.constant dense<0.000000e+00> : vector<128x256xf32>
    %6 = tpu.matmul %3, %4, %cst {dimension_numbers = #tpu.dot_dimension_numbers<[1], [0], [0], [1], [0, 0, 1, 1], [], []>} : vector<128x128xf32>, vector<128x256xf32>, vector<128x256xf32> -> vector<128x256xf32>
    %7 = arith.addf %5, %6 : vector<128x256xf32>
    %c0_6 = arith.constant 0 : index
    %c0_7 = arith.constant 0 : index
    %8 = vector.load %arg5[%c0_6, %c0_7] : memref<128x256xf32, #tpu.memory_space<vmem>>, vector<128x256xf32>
    tpu.vector_store %arg5[%c0_6, %c0_7], %7 {strides = array<i32>} : memref<128x256xf32, #tpu.memory_space<vmem>>, vector<128x256xf32>,
    %9 = arith.cmpi eq, %arg1, %arg0 : i32
    %10 = arith.extui %9 : i1 to i32
    %c0_i32_8 = arith.constant 0 : i32
    %11 = arith.cmpi ne, %10, %c0_i32_8 : i32
    scf.if %11 {
      %c0_11 = arith.constant 0 : index
      %c0_12 = arith.constant 0 : index
      %15 = vector.load %arg5[%c0_11, %c0_12] : memref<128x256xf32, #tpu.memory_space<vmem>>, vector<128x256xf32>
      %c0_13 = arith.constant 0 : index
      %c0_14 = arith.constant 0 : index
      %16 = vector.load %arg3[%c0_13, %c0_14] : memref<128x256xf32, #tpu.memory_space<vmem>>, vector<128x256xf32>
      %17 = arith.subf %15, %16 : vector<128x256xf32>
      %c0_15 = arith.constant 0 : index
      %c0_16 = arith.constant 0 : index
      %18 = vector.load %arg5[%c0_15, %c0_16] : memref<128x256xf32, #tpu.memory_space<vmem>>, vector<128x256xf32>
      tpu.vector_store %arg5[%c0_15, %c0_16], %17 {strides = array<i32>} : memref<128x256xf32, #tpu.memory_space<vmem>>, vector<128x256xf32>,
    } else {
    }
    %c0_i32_9 = arith.constant 0 : i32
    %12 = arith.cmpi eq, %arg1, %c0_i32_9 : i32
    %13 = arith.extui %12 : i1 to i32
    %c0_i32_10 = arith.constant 0 : i32
    %14 = arith.cmpi ne, %13, %c0_i32_10 : i32
    scf.if %14 {
      %c0_11 = arith.constant 0 : index
      %c0_12 = arith.constant 0 : index
      %15 = vector.load %arg5[%c0_11, %c0_12] : memref<128x256xf32, #tpu.memory_space<vmem>>, vector<128x256xf32>
      %16 = arith.mulf %15, %15 : vector<128x256xf32>
      %17 = vector.shape_cast %16 : vector<128x256xf32> to vector<16x8x2x128xf32>
      %cst_13 = arith.constant dense<0.000000e+00> : vector<8x128xf32>
      %18 = vector.multi_reduction <add>, %17, %cst_13 [0, 2] : vector<16x8x2x128xf32> to vector<8x128xf32>
      %cst_14 = arith.constant 5.000000e-01 : f32
      %19 = vector.broadcast %cst_14 : f32 to vector<8x128xf32>
      %20 = arith.mulf %19, %18 : vector<8x128xf32>
      %c0_15 = arith.constant 0 : index
      %c0_16 = arith.constant 0 : index
      %21 = vector.load %arg4[%c0_15, %c0_16] : memref<8x128xf32, #tpu.memory_space<vmem>>, vector<8x128xf32>
      tpu.vector_store %arg4[%c0_15, %c0_16], %20 {strides = array<i32>} : memref<8x128xf32, #tpu.memory_space<vmem>>, vector<8x128xf32>,
    } else {
    }
    return
  }
  func.func @transform_0(%arg0: i32, %arg1: i32) -> (i32, i32) {
    %c0_i32 = arith.constant 0 : i32
    return %arg0, %arg1 : i32, i32
  }
  func.func @transform_1(%arg0: i32, %arg1: i32) -> (i32, i32) {
    %c0_i32 = arith.constant 0 : i32
    %c0_i32_0 = arith.constant 0 : i32
    return %arg1, %c0_i32 : i32, i32
  }
  func.func @transform_2(%arg0: i32, %arg1: i32) -> (i32, i32) {
    %c0_i32 = arith.constant 0 : i32
    %c0_i32_0 = arith.constant 0 : i32
    return %arg0, %c0_i32 : i32, i32
  }
}

</mosaic_0001>

<llo_original>
// kernel: tpu_custom_call.1
$region0: #{tpu_custom_call.1}
  #allocation0 [shape = 'u32[]', space=smem, size = 0x4, offset = 0x4, fixed_abs, tag = 'smem constant byte address 0x4 - core index']
  #allocation1 [shape = 'u32[144,128]{1,0:T(1,128)}', space=vmem, size = 0x12000, scoped, tag = 'internal scratch']
  #allocation2 [shape = 'f32[128,256]{1,0:T(8,128)}', space=vmem, size = 0x20000, scoped, tag = 'scratch operand']
  %s0 = inlined_call_operand.hbm [shape: f32[128,128], index: 0, kind: input, shape index: {}]
  %s1 = inlined_call_operand.hbm [shape: f32[128,256], index: 1, kind: input, shape index: {}]
  %s2 = inlined_call_operand.hbm [shape: f32[8,128], index: 2, kind: output, shape index: {}]
  %s3 = sld [smem:[#allocation0]]
  $region38: #{tpu_custom_call.1} parent=0
    _
  %s5 = ssub.s32 1, %s3
  %s6 = scalar_select 0, %s5, %s3
  $region1: #{tpu_custom_call.1} parent=0
    #allocation3 [shape = 'u8[65536]{0}', space=vmem, size = 0x10000, scoped, tag = 'input window, operand 0, single buffered']
    #allocation4 [shape = 's32[1]{0}', space=sflag, size = 0x4, scoped, tag = 'scoped memory for tpu_custom_call.1']
    #allocation5 [shape = 's32[1]{0}', space=sflag, size = 0x4, scoped, tag = 'scoped memory for tpu_custom_call.1']
    #allocation6 [shape = 'u8[131072]{0}', space=vmem, size = 0x20000, scoped, tag = 'input window, operand 1, single buffered']
    #allocation7 [shape = 's32[1]{0}', space=sflag, size = 0x4, scoped, tag = 'scoped memory for tpu_custom_call.1']
    #allocation8 [shape = 'u8[4096]{0}', space=vmem, size = 0x1000, scoped, tag = 'output window, operand 0, single buffered']
    %7 = vsyncpa [#allocation4], 0
    %8 = vsyncpa [#allocation7], 0
    %9 = vsyncpa [#allocation5], 0
    // Predicated region
    $region2: #{tpu_custom_call.1} parent=1 // pred_check
      _
    $region3: #{tpu_custom_call.1} parent=1 // pred_check_branch
      %11 = sbr.rel (0) target = $region5
    $region4: #{tpu_custom_call.1} parent=1 // pred_region
      %s13 = ssub.s32 2048, 2048
      %14 = vsyncadd [#allocation4], %s13
      %s15 = sshll.u32 [#allocation3], 4
      %s16 = int_to_ptr.vmem [resolvable:$true] %s15
      %21 = dma.hbm_to_vmem [thread:$0]  %s0, 2048, %s16, [#allocation4], 128, 128, 8
    $region5: #{tpu_custom_call.1} parent=1 // pred_fallthru
      _
    // Predicated region
    $region6: #{tpu_custom_call.1} parent=1 // pred_check
      _
    $region7: #{tpu_custom_call.1} parent=1 // pred_check_branch
      %23 = sbr.rel (0) target = $region9
    $region8: #{tpu_custom_call.1} parent=1 // pred_region
      %s25 = ssub.s32 4096, 4096
      %26 = vsyncadd [#allocation7], %s25
      %s27 = sshll.u32 [#allocation6], 4
      %s28 = int_to_ptr.vmem [resolvable:$true] %s27
      %33 = dma.hbm_to_vmem [thread:$0]  %s1, 4096, %s28, [#allocation7], 256, 256, 16
    $region9: #{tpu_custom_call.1} parent=1 // pred_fallthru
      _
    // Predicated region
    $region10: #{tpu_custom_call.1} parent=1 // pred_check
      _
    $region11: #{tpu_custom_call.1} parent=1 // pred_check_branch
      %35 = sbr.rel (0) target = $region13
    $region12: #{tpu_custom_call.1} parent=1 // pred_region
      %36 = dma.done [#allocation4], 2048
    $region13: #{tpu_custom_call.1} parent=1 // pred_fallthru
      _
    // Predicated region
    $region14: #{tpu_custom_call.1} parent=1 // pred_check
      _
    $region15: #{tpu_custom_call.1} parent=1 // pred_check_branch
      %38 = sbr.rel (0) target = $region17
    $region16: #{tpu_custom_call.1} parent=1 // pred_region
      %39 = dma.done [#allocation7], 4096
    $region17: #{tpu_custom_call.1} parent=1 // pred_fallthru
      _
    %p40 = scmp.eq.s32.totalorder 0, 0
    // Predicated region
    $region18: #{tpu_custom_call.1} parent=1 // pred_check
      %p41 = pneg %p40
    $region19: #{tpu_custom_call.1} parent=1 // pred_check_branch
      %43 = sbr.rel (%p41) target = $region21
    $region20: #{tpu_custom_call.1} parent=1 // pred_region
      %44 = vst [vmem:[#allocation2] sm:$0xff] 0.0
      %45 = vst [vmem:[#allocation2 + $0x8] sm:$0xff] 0.0
      %46 = vst [vmem:[#allocation2 + $0x10] sm:$0xff] 0.0
      %47 = vst [vmem:[#allocation2 + $0x18] sm:$0xff] 0.0
      %48 = vst [vmem:[#allocation2 + $0x20] sm:$0xff] 0.0
      %49 = vst [vmem:[#allocation2 + $0x28] sm:$0xff] 0.0
      %50 = vst [vmem:[#allocation2 + $0x30] sm:$0xff] 0.0
      %51 = vst [vmem:[#allocation2 + $0x38] sm:$0xff] 0.0
      %52 = vst [vmem:[#allocation2 + $0x40] sm:$0xff] 0.0
      %53 = vst [vmem:[#allocation2 + $0x48] sm:$0xff] 0.0
      %54 = vst [vmem:[#allocation2 + $0x50] sm:$0xff] 0.0
      %55 = vst [vmem:[#allocation2 + $0x58] sm:$0xff] 0.0
      %56 = vst [vmem:[#allocation2 + $0x60] sm:$0xff] 0.0
      %57 = vst [vmem:[#allocation2 + $0x68] sm:$0xff] 0.0
      %58 = vst [vmem:[#allocation2 + $0x70] sm:$0xff] 0.0
      %59 = vst [vmem:[#allocation2 + $0x78] sm:$0xff] 0.0
      %60 = vst [vmem:[#allocation2 + $0x80] sm:$0xff] 0.0
      %61 = vst [vmem:[#allocation2 + $0x88] sm:$0xff] 0.0
      %62 = vst [vmem:[#allocation2 + $0x90] sm:$0xff] 0.0
      %63 = vst [vmem:[#allocation2 + $0x98] sm:$0xff] 0.0
      %64 = vst [vmem:[#allocation2 + $0xa0] sm:$0xff] 0.0
      %65 = vst [vmem:[#allocation2 + $0xa8] sm:$0xff] 0.0
      %66 = vst [vmem:[#allocation2 + $0xb0] sm:$0xff] 0.0
      %67 = vst [vmem:[#allocation2 + $0xb8] sm:$0xff] 0.0
      %68 = vst [vmem:[#allocation2 + $0xc0] sm:$0xff] 0.0
      %69 = vst [vmem:[#allocation2 + $0xc8] sm:$0xff] 0.0
      %70 = vst [vmem:[#allocation2 + $0xd0] sm:$0xff] 0.0
      %71 = vst [vmem:[#allocation2 + $0xd8] sm:$0xff] 0.0
      %72 = vst [vmem:[#allocation2 + $0xe0] sm:$0xff] 0.0
      %73 = vst [vmem:[#allocation2 + $0xe8] sm:$0xff] 0.0
      %74 = vst [vmem:[#allocation2 + $0xf0] sm:$0xff] 0.0
      %75 = vst [vmem:[#allocation2 + $0xf8] sm:$0xff] 0.0
    $region21: #{tpu_custom_call.1} parent=1 // pred_fallthru
      _
    %v76 = vld [vmem:[#allocation3] sm:$0xff]
    %v77 = vld [vmem:[#allocation3 + $0x8] sm:$0xff]
    %v78 = vld [vmem:[#allocation3 + $0x10] sm:$0xff]
    %v79 = vld [vmem:[#allocation3 + $0x18] sm:$0xff]
    %v80 = vld [vmem:[#allocation3 + $0x20] sm:$0xff]
    %v81 = vld [vmem:[#allocation3 + $0x28] sm:$0xff]
    %v82 = vld [vmem:[#allocation3 + $0x30] sm:$0xff]
    %v83 = vld [vmem:[#allocation3 + $0x38] sm:$0xff]
    %v84 = vld [vmem:[#allocation3 + $0x40] sm:$0xff]
    %v85 = vld [vmem:[#allocation3 + $0x48] sm:$0xff]
    %v86 = vld [vmem:[#allocation3 + $0x50] sm:$0xff]
    %v87 = vld [vmem:[#allocation3 + $0x58] sm:$0xff]
    %v88 = vld [vmem:[#allocation3 + $0x60] sm:$0xff]
    %v89 = vld [vmem:[#allocation3 + $0x68] sm:$0xff]
    %v90 = vld [vmem:[#allocation3 + $0x70] sm:$0xff]
    %v91 = vld [vmem:[#allocation3 + $0x78] sm:$0xff]
    %v92 = vld [vmem:[#allocation6] sm:$0xff]
    %v93 = vld [vmem:[#allocation6 + $0x8] sm:$0xff]
    %v94 = vld [vmem:[#allocation6 + $0x10] sm:$0xff]
    %v95 = vld [vmem:[#allocation6 + $0x18] sm:$0xff]
    %v96 = vld [vmem:[#allocation6 + $0x20] sm:$0xff]
    %v97 = vld [vmem:[#allocation6 + $0x28] sm:$0xff]
    %v98 = vld [vmem:[#allocation6 + $0x30] sm:$0xff]
    %v99 = vld [vmem:[#allocation6 + $0x38] sm:$0xff]
    %v100 = vld [vmem:[#allocation6 + $0x40] sm:$0xff]
    %v101 = vld [vmem:[#allocation6 + $0x48] sm:$0xff]
    %v102 = vld [vmem:[#allocation6 + $0x50] sm:$0xff]
    %v103 = vld [vmem:[#allocation6 + $0x58] sm:$0xff]
    %v104 = vld [vmem:[#allocation6 + $0x60] sm:$0xff]
    %v105 = vld [vmem:[#allocation6 + $0x68] sm:$0xff]
    %v106 = vld [vmem:[#allocation6 + $0x70] sm:$0xff]
    %v107 = vld [vmem:[#allocation6 + $0x78] sm:$0xff]
    %v108 = vld [vmem:[#allocation6 + $0x80] sm:$0xff]
    %v109 = vld [vmem:[#allocation6 + $0x88] sm:$0xff]
    %v110 = vld [vmem:[#allocation6 + $0x90] sm:$0xff]
    %v111 = vld [vmem:[#allocation6 + $0x98] sm:$0xff]
    %v112 = vld [vmem:[#allocation6 + $0xa0] sm:$0xff]
    %v113 = vld [vmem:[#allocation6 + $0xa8] sm:$0xff]
    %v114 = vld [vmem:[#allocation6 + $0xb0] sm:$0xff]
    %v115 = vld [vmem:[#allocation6 + $0xb8] sm:$0xff]
    %v116 = vld [vmem:[#allocation6 + $0xc0] sm:$0xff]
    %v117 = vld [vmem:[#allocation6 + $0xc8] sm:$0xff]
    %v118 = vld [vmem:[#allocation6 + $0xd0] sm:$0xff]
    %v119 = vld [vmem:[#allocation6 + $0xd8] sm:$0xff]
    %v120 = vld [vmem:[#allocation6 + $0xe0] sm:$0xff]
    %v121 = vld [vmem:[#allocation6 + $0xe8] sm:$0xff]
    %v122 = vld [vmem:[#allocation6 + $0xf0] sm:$0xff]
    %v123 = vld [vmem:[#allocation6 + $0xf8] sm:$0xff]
    %v124 = vld [vmem:[#allocation2] sm:$0xff]
    %v125 = vld [vmem:[#allocation2 + $0x8] sm:$0xff]
    %v126 = vld [vmem:[#allocation2 + $0x10] sm:$0xff]
    %v127 = vld [vmem:[#allocation2 + $0x18] sm:$0xff]
    %v128 = vld [vmem:[#allocation2 + $0x20] sm:$0xff]
    %v129 = vld [vmem:[#allocation2 + $0x28] sm:$0xff]
    %v130 = vld [vmem:[#allocation2 + $0x30] sm:$0xff]
    %v131 = vld [vmem:[#allocation2 + $0x38] sm:$0xff]
    %v132 = vld [vmem:[#allocation2 + $0x40] sm:$0xff]
    %v133 = vld [vmem:[#allocation2 + $0x48] sm:$0xff]
    %v134 = vld [vmem:[#allocation2 + $0x50] sm:$0xff]
    %v135 = vld [vmem:[#allocation2 + $0x58] sm:$0xff]
    %v136 = vld [vmem:[#allocation2 + $0x60] sm:$0xff]
    %v137 = vld [vmem:[#allocation2 + $0x68] sm:$0xff]
    %v138 = vld [vmem:[#allocation2 + $0x70] sm:$0xff]
    %v139 = vld [vmem:[#allocation2 + $0x78] sm:$0xff]
    %v140 = vld [vmem:[#allocation2 + $0x80] sm:$0xff]
    %v141 = vld [vmem:[#allocation2 + $0x88] sm:$0xff]
    %v142 = vld [vmem:[#allocation2 + $0x90] sm:$0xff]
    %v143 = vld [vmem:[#allocation2 + $0x98] sm:$0xff]
    %v144 = vld [vmem:[#allocation2 + $0xa0] sm:$0xff]
    %v145 = vld [vmem:[#allocation2 + $0xa8] sm:$0xff]
    %v146 = vld [vmem:[#allocation2 + $0xb0] sm:$0xff]
    %v147 = vld [vmem:[#allocation2 + $0xb8] sm:$0xff]
    %v148 = vld [vmem:[#allocation2 + $0xc0] sm:$0xff]
    %v149 = vld [vmem:[#allocation2 + $0xc8] sm:$0xff]
    %v150 = vld [vmem:[#allocation2 + $0xd0] sm:$0xff]
    %v151 = vld [vmem:[#allocation2 + $0xd8] sm:$0xff]
    %v152 = vld [vmem:[#allocation2 + $0xe0] sm:$0xff]
    %v153 = vld [vmem:[#allocation2 + $0xe8] sm:$0xff]
    %v154 = vld [vmem:[#allocation2 + $0xf0] sm:$0xff]
    %v155 = vld [vmem:[#allocation2 + $0xf8] sm:$0xff]
    %156 = vmatprep.subr.mxu0 %v93
    %157 = vmatpush1.msra.mxu0 %v92
    %158 = vmatprep.subr.mxu0 %v95
    %159 = vmatpush1.msra.mxu0 %v94
    %160 = vmatprep.subr.mxu0 %v97
    %161 = vmatpush1.msra.mxu0 %v96
    %162 = vmatprep.subr.mxu0 %v99
    %163 = vmatpush1.msra.mxu0 %v98
    %164 = vmatprep.subr.mxu0 %v101
    %165 = vmatpush1.msra.mxu0 %v100
    %166 = vmatprep.subr.mxu0 %v103
    %167 = vmatpush1.msra.mxu0 %v102
    %168 = vmatprep.subr.mxu0 %v105
    %169 = vmatpush1.msra.mxu0 %v104
    %170 = vmatprep.subr.mxu0 %v107
    %171 = vmatpush1.msra.mxu0 %v106
    %172 = vmatprep.subr.mxu0 %v109
    %173 = vmatpush1.msra.mxu0 %v108
    %174 = vmatprep.subr.mxu0 %v111
    %175 = vmatpush1.msra.mxu0 %v110
    %176 = vmatprep.subr.mxu0 %v113
    %177 = vmatpush1.msra.mxu0 %v112
    %178 = vmatprep.subr.mxu0 %v115
    %179 = vmatpush1.msra.mxu0 %v114
    %180 = vmatprep.subr.mxu0 %v117
    %181 = vmatpush1.msra.mxu0 %v116
    %182 = vmatprep.subr.mxu0 %v119
    %183 = vmatpush1.msra.mxu0 %v118
    %184 = vmatprep.subr.mxu0 %v121
    %185 = vmatpush1.msra.mxu0 %v120
    %186 = vmatprep.subr.mxu0 %v123
    %187 = vmatpush1.msra.mxu0 %v122
    %188 = vmatprep.subr.mxu0 0.0
    %189 = vmatpush1.msra.mxu0 0.0
    %190 = vmatprep.subr.mxu0 0.0
    %191 = vmatpush1.msra.mxu0 0.0
    %192 = vmatprep.subr.mxu0 0.0
    %193 = vmatpush1.msra.mxu0 0.0
    %194 = vmatprep.subr.mxu0 0.0
    %195 = vmatpush1.msra.mxu0 0.0
    %196 = vmatprep.subr.mxu0 0.0
    %197 = vmatpush1.msra.mxu0 0.0
    %198 = vmatprep.subr.mxu0 0.0
    %199 = vmatpush1.msra.mxu0 0.0
    %200 = vmatprep.subr.mxu0 0.0
    %201 = vmatpush1.msra.mxu0 0.0
    %202 = vmatprep.subr.mxu0 0.0
    %203 = vmatpush1.msra.mxu0 0.0
    %204 = vmatprep.subr.mxu0 0.0
    %205 = vmatpush1.msra.mxu0 0.0
    %206 = vmatprep.subr.mxu0 0.0
    %207 = vmatpush1.msra.mxu0 0.0
    %208 = vmatprep.subr.mxu0 0.0
    %209 = vmatpush1.msra.mxu0 0.0
    %210 = vmatprep.subr.mxu0 0.0
    %211 = vmatpush1.msra.mxu0 0.0
    %212 = vmatprep.subr.mxu0 0.0
    %213 = vmatpush1.msra.mxu0 0.0
    %214 = vmatprep.subr.mxu0 0.0
    %215 = vmatpush1.msra.mxu0 0.0
    %216 = vmatprep.subr.mxu0 0.0
    %217 = vmatpush1.msra.mxu0 0.0
    %218 = vmatprep.subr.mxu0 0.0
    %219 = vmatpush1.msra.mxu0 0.0
    %220 = vmatprep.mubr.f32.mxu0 0.0
    %221 = vmatmul.mubr.f32.gmra.mrb[0].mxu0 %v76
    %v222 = vpop.f32.mrb[0].mxu0
    %v223 = vadd.f32 0.0, %v222
    %v224 = vpop.f32.mrb[0].mxu0
    %v225 = vadd.f32 0.0, %v224
    %226 = vmatprep.mubr.f32.mxu0 0.0
    %227 = vmatmul.mubr.f32.gmra.mrb[0].mxu0 %v77
    %v228 = vpop.f32.mrb[0].mxu0
    %v229 = vadd.f32 0.0, %v228
    %v230 = vpop.f32.mrb[0].mxu0
    %v231 = vadd.f32 0.0, %v230
    %232 = vmatprep.mubr.f32.mxu0 0.0
    %233 = vmatmul.mubr.f32.gmra.mrb[0].mxu0 %v78
    %v234 = vpop.f32.mrb[0].mxu0
    %v235 = vadd.f32 0.0, %v234
    %v236 = vpop.f32.mrb[0].mxu0
    %v237 = vadd.f32 0.0, %v236
    %238 = vmatprep.mubr.f32.mxu0 0.0
    %239 = vmatmul.mubr.f32.gmra.mrb[0].mxu0 %v79
    %v240 = vpop.f32.mrb[0].mxu0
    %v241 = vadd.f32 0.0, %v240
    %v242 = vpop.f32.mrb[0].mxu0
    %v243 = vadd.f32 0.0, %v242
    %244 = vmatprep.mubr.f32.mxu0 0.0
    %245 = vmatmul.mubr.f32.gmra.mrb[0].mxu0 %v80
    %v246 = vpop.f32.mrb[0].mxu0
    %v247 = vadd.f32 0.0, %v246
    %v248 = vpop.f32.mrb[0].mxu0
    %v249 = vadd.f32 0.0, %v248
    %250 = vmatprep.mubr.f32.mxu0 0.0
    %251 = vmatmul.mubr.f32.gmra.mrb[0].mxu0 %v81
    %v252 = vpop.f32.mrb[0].mxu0
    %v253 = vadd.f32 0.0, %v252
    %v254 = vpop.f32.mrb[0].mxu0
    %v255 = vadd.f32 0.0, %v254
    %256 = vmatprep.mubr.f32.mxu0 0.0
    %257 = vmatmul.mubr.f32.gmra.mrb[0].mxu0 %v82
    %v258 = vpop.f32.mrb[0].mxu0
    %v259 = vadd.f32 0.0, %v258
    %v260 = vpop.f32.mrb[0].mxu0
    %v261 = vadd.f32 0.0, %v260
    %262 = vmatprep.mubr.f32.mxu0 0.0
    %263 = vmatmul.mubr.f32.gmra.mrb[0].mxu0 %v83
    %v264 = vpop.f32.mrb[0].mxu0
    %v265 = vadd.f32 0.0, %v264
    %v266 = vpop.f32.mrb[0].mxu0
    %v267 = vadd.f32 0.0, %v266
    %268 = vmatprep.mubr.f32.mxu0 0.0
    %269 = vmatmul.mubr.f32.gmra.mrb[0].mxu0 %v84
    %v270 = vpop.f32.mrb[0].mxu0
    %v271 = vadd.f32 0.0, %v270
    %v272 = vpop.f32.mrb[0].mxu0
    %v273 = vadd.f32 0.0, %v272
    %274 = vmatprep.mubr.f32.mxu0 0.0
    %275 = vmatmul.mubr.f32.gmra.mrb[0].mxu0 %v85
    %v276 = vpop.f32.mrb[0].mxu0
    %v277 = vadd.f32 0.0, %v276
    %v278 = vpop.f32.mrb[0].mxu0
    %v279 = vadd.f32 0.0, %v278
    %280 = vmatprep.mubr.f32.mxu0 0.0
    %281 = vmatmul.mubr.f32.gmra.mrb[0].mxu0 %v86
    %v282 = vpop.f32.mrb[0].mxu0
    %v283 = vadd.f32 0.0, %v282
    %v284 = vpop.f32.mrb[0].mxu0
    %v285 = vadd.f32 0.0, %v284
    %286 = vmatprep.mubr.f32.mxu0 0.0
    %287 = vmatmul.mubr.f32.gmra.mrb[0].mxu0 %v87
    %v288 = vpop.f32.mrb[0].mxu0
    %v289 = vadd.f32 0.0, %v288
    %v290 = vpop.f32.mrb[0].mxu0
    %v291 = vadd.f32 0.0, %v290
    %292 = vmatprep.mubr.f32.mxu0 0.0
    %293 = vmatmul.mubr.f32.gmra.mrb[0].mxu0 %v88
    %v294 = vpop.f32.mrb[0].mxu0
    %v295 = vadd.f32 0.0, %v294
    %v296 = vpop.f32.mrb[0].mxu0
    %v297 = vadd.f32 0.0, %v296
    %298 = vmatprep.mubr.f32.mxu0 0.0
    %299 = vmatmul.mubr.f32.gmra.mrb[0].mxu0 %v89
    %v300 = vpop.f32.mrb[0].mxu0
    %v301 = vadd.f32 0.0, %v300
    %v302 = vpop.f32.mrb[0].mxu0
    %v303 = vadd.f32 0.0, %v302
    %304 = vmatprep.mubr.f32.mxu0 0.0
    %305 = vmatmul.mubr.f32.gmra.mrb[0].mxu0 %v90
    %v306 = vpop.f32.mrb[0].mxu0
    %v307 = vadd.f32 0.0, %v306
    %v308 = vpop.f32.mrb[0].mxu0
    %v309 = vadd.f32 0.0, %v308
    %310 = vmatprep.mubr.f32.mxu0 0.0
    %311 = vmatmul.mubr.f32.gmra.mrb[0].mxu0 %v91
    %v312 = vpop.f32.mrb[0].mxu0
    %v313 = vadd.f32 0.0, %v312
    %v314 = vpop.f32.mrb[0].mxu0
    %v315 = vadd.f32 0.0, %v314
    %316 = vdwg.mxu0
    %v317 = vadd.f32 %v124, %v223
    %v318 = vadd.f32 %v125, %v225
    %v319 = vadd.f32 %v126, %v229
    %v320 = vadd.f32 %v127, %v231
    %v321 = vadd.f32 %v128, %v235
    %v322 = vadd.f32 %v129, %v237
    %v323 = vadd.f32 %v130, %v241
    %v324 = vadd.f32 %v131, %v243
    %v325 = vadd.f32 %v132, %v247
    %v326 = vadd.f32 %v133, %v249
    %v327 = vadd.f32 %v134, %v253
    %v328 = vadd.f32 %v135, %v255
    %v329 = vadd.f32 %v136, %v259
    %v330 = vadd.f32 %v137, %v261
    %v331 = vadd.f32 %v138, %v265
    %v332 = vadd.f32 %v139, %v267
    %v333 = vadd.f32 %v140, %v271
    %v334 = vadd.f32 %v141, %v273
    %v335 = vadd.f32 %v142, %v277
    %v336 = vadd.f32 %v143, %v279
    %v337 = vadd.f32 %v144, %v283
    %v338 = vadd.f32 %v145, %v285
    %v339 = vadd.f32 %v146, %v289
    %v340 = vadd.f32 %v147, %v291
    %v341 = vadd.f32 %v148, %v295
    %v342 = vadd.f32 %v149, %v297
    %v343 = vadd.f32 %v150, %v301
    %v344 = vadd.f32 %v151, %v303
    %v345 = vadd.f32 %v152, %v307
    %v346 = vadd.f32 %v153, %v309
    %v347 = vadd.f32 %v154, %v313
    %v348 = vadd.f32 %v155, %v315
    %349 = vst [vmem:[#allocation2] sm:$0xff] %v317
    %350 = vst [vmem:[#allocation2 + $0x8] sm:$0xff] %v318
    %351 = vst [vmem:[#allocation2 + $0x10] sm:$0xff] %v319
    %352 = vst [vmem:[#allocation2 + $0x18] sm:$0xff] %v320
    %353 = vst [vmem:[#allocation2 + $0x20] sm:$0xff] %v321
    %354 = vst [vmem:[#allocation2 + $0x28] sm:$0xff] %v322
    %355 = vst [vmem:[#allocation2 + $0x30] sm:$0xff] %v323
    %356 = vst [vmem:[#allocation2 + $0x38] sm:$0xff] %v324
    %357 = vst [vmem:[#allocation2 + $0x40] sm:$0xff] %v325
    %358 = vst [vmem:[#allocation2 + $0x48] sm:$0xff] %v326
    %359 = vst [vmem:[#allocation2 + $0x50] sm:$0xff] %v327
    %360 = vst [vmem:[#allocation2 + $0x58] sm:$0xff] %v328
    %361 = vst [vmem:[#allocation2 + $0x60] sm:$0xff] %v329
    %362 = vst [vmem:[#allocation2 + $0x68] sm:$0xff] %v330
    %363 = vst [vmem:[#allocation2 + $0x70] sm:$0xff] %v331
    %364 = vst [vmem:[#allocation2 + $0x78] sm:$0xff] %v332
    %365 = vst [vmem:[#allocation2 + $0x80] sm:$0xff] %v333
    %366 = vst [vmem:[#allocation2 + $0x88] sm:$0xff] %v334
    %367 = vst [vmem:[#allocation2 + $0x90] sm:$0xff] %v335
    %368 = vst [vmem:[#allocation2 + $0x98] sm:$0xff] %v336
    %369 = vst [vmem:[#allocation2 + $0xa0] sm:$0xff] %v337
    %370 = vst [vmem:[#allocation2 + $0xa8] sm:$0xff] %v338
    %371 = vst [vmem:[#allocation2 + $0xb0] sm:$0xff] %v339
    %372 = vst [vmem:[#allocation2 + $0xb8] sm:$0xff] %v340
    %373 = vst [vmem:[#allocation2 + $0xc0] sm:$0xff] %v341
    %374 = vst [vmem:[#allocation2 + $0xc8] sm:$0xff] %v342
    %375 = vst [vmem:[#allocation2 + $0xd0] sm:$0xff] %v343
    %376 = vst [vmem:[#allocation2 + $0xd8] sm:$0xff] %v344
    %377 = vst [vmem:[#allocation2 + $0xe0] sm:$0xff] %v345
    %378 = vst [vmem:[#allocation2 + $0xe8] sm:$0xff] %v346
    %379 = vst [vmem:[#allocation2 + $0xf0] sm:$0xff] %v347
    %380 = vst [vmem:[#allocation2 + $0xf8] sm:$0xff] %v348
    %p381 = scmp.eq.s32.totalorder 0, 0
    // Predicated region
    $region22: #{tpu_custom_call.1} parent=1 // pred_check
      %p382 = pneg %p381
    $region23: #{tpu_custom_call.1} parent=1 // pred_check_branch
      %384 = sbr.rel (%p382) target = $region25
    $region24: #{tpu_custom_call.1} parent=1 // pred_region
      %v385 = vld [vmem:[#allocation2] sm:$0xff]
      %v386 = vld [vmem:[#allocation2 + $0x8] sm:$0xff]
      %v387 = vld [vmem:[#allocation2 + $0x10] sm:$0xff]
      %v388 = vld [vmem:[#allocation2 + $0x18] sm:$0xff]
      %v389 = vld [vmem:[#allocation2 + $0x20] sm:$0xff]
      %v390 = vld [vmem:[#allocation2 + $0x28] sm:$0xff]
      %v391 = vld [vmem:[#allocation2 + $0x30] sm:$0xff]
      %v392 = vld [vmem:[#allocation2 + $0x38] sm:$0xff]
      %v393 = vld [vmem:[#allocation2 + $0x40] sm:$0xff]
      %v394 = vld [vmem:[#allocation2 + $0x48] sm:$0xff]
      %v395 = vld [vmem:[#allocation2 + $0x50] sm:$0xff]
      %v396 = vld [vmem:[#allocation2 + $0x58] sm:$0xff]
      %v397 = vld [vmem:[#allocation2 + $0x60] sm:$0xff]
      %v398 = vld [vmem:[#allocation2 + $0x68] sm:$0xff]
      %v399 = vld [vmem:[#allocation2 + $0x70] sm:$0xff]
      %v400 = vld [vmem:[#allocation2 + $0x78] sm:$0xff]
      %v401 = vld [vmem:[#allocation2 + $0x80] sm:$0xff]
      %v402 = vld [vmem:[#allocation2 + $0x88] sm:$0xff]
      %v403 = vld [vmem:[#allocation2 + $0x90] sm:$0xff]
      %v404 = vld [vmem:[#allocation2 + $0x98] sm:$0xff]
      %v405 = vld [vmem:[#allocation2 + $0xa0] sm:$0xff]
      %v406 = vld [vmem:[#allocation2 + $0xa8] sm:$0xff]
      %v407 = vld [vmem:[#allocation2 + $0xb0] sm:$0xff]
      %v408 = vld [vmem:[#allocation2 + $0xb8] sm:$0xff]
      %v409 = vld [vmem:[#allocation2 + $0xc0] sm:$0xff]
      %v410 = vld [vmem:[#allocation2 + $0xc8] sm:$0xff]
      %v411 = vld [vmem:[#allocation2 + $0xd0] sm:$0xff]
      %v412 = vld [vmem:[#allocation2 + $0xd8] sm:$0xff]
      %v413 = vld [vmem:[#allocation2 + $0xe0] sm:$0xff]
      %v414 = vld [vmem:[#allocation2 + $0xe8] sm:$0xff]
      %v415 = vld [vmem:[#allocation2 + $0xf0] sm:$0xff]
      %v416 = vld [vmem:[#allocation2 + $0xf8] sm:$0xff]
      %v417 = vld [vmem:[#allocation6] sm:$0xff]
      %v418 = vld [vmem:[#allocation6 + $0x8] sm:$0xff]
      %v419 = vld [vmem:[#allocation6 + $0x10] sm:$0xff]
      %v420 = vld [vmem:[#allocation6 + $0x18] sm:$0xff]
      %v421 = vld [vmem:[#allocation6 + $0x20] sm:$0xff]
      %v422 = vld [vmem:[#allocation6 + $0x28] sm:$0xff]
      %v423 = vld [vmem:[#allocation6 + $0x30] sm:$0xff]
      %v424 = vld [vmem:[#allocation6 + $0x38] sm:$0xff]
      %v425 = vld [vmem:[#allocation6 + $0x40] sm:$0xff]
      %v426 = vld [vmem:[#allocation6 + $0x48] sm:$0xff]
      %v427 = vld [vmem:[#allocation6 + $0x50] sm:$0xff]
      %v428 = vld [vmem:[#allocation6 + $0x58] sm:$0xff]
      %v429 = vld [vmem:[#allocation6 + $0x60] sm:$0xff]
      %v430 = vld [vmem:[#allocation6 + $0x68] sm:$0xff]
      %v431 = vld [vmem:[#allocation6 + $0x70] sm:$0xff]
      %v432 = vld [vmem:[#allocation6 + $0x78] sm:$0xff]
      %v433 = vld [vmem:[#allocation6 + $0x80] sm:$0xff]
      %v434 = vld [vmem:[#allocation6 + $0x88] sm:$0xff]
      %v435 = vld [vmem:[#allocation6 + $0x90] sm:$0xff]
      %v436 = vld [vmem:[#allocation6 + $0x98] sm:$0xff]
      %v437 = vld [vmem:[#allocation6 + $0xa0] sm:$0xff]
      %v438 = vld [vmem:[#allocation6 + $0xa8] sm:$0xff]
      %v439 = vld [vmem:[#allocation6 + $0xb0] sm:$0xff]
      %v440 = vld [vmem:[#allocation6 + $0xb8] sm:$0xff]
      %v441 = vld [vmem:[#allocation6 + $0xc0] sm:$0xff]
      %v442 = vld [vmem:[#allocation6 + $0xc8] sm:$0xff]
      %v443 = vld [vmem:[#allocation6 + $0xd0] sm:$0xff]
      %v444 = vld [vmem:[#allocation6 + $0xd8] sm:$0xff]
      %v445 = vld [vmem:[#allocation6 + $0xe0] sm:$0xff]
      %v446 = vld [vmem:[#allocation6 + $0xe8] sm:$0xff]
      %v447 = vld [vmem:[#allocation6 + $0xf0] sm:$0xff]
      %v448 = vld [vmem:[#allocation6 + $0xf8] sm:$0xff]
      %v449 = vsub.f32 %v385, %v417
      %v450 = vsub.f32 %v386, %v418
      %v451 = vsub.f32 %v387, %v419
      %v452 = vsub.f32 %v388, %v420
      %v453 = vsub.f32 %v389, %v421
      %v454 = vsub.f32 %v390, %v422
      %v455 = vsub.f32 %v391, %v423
      %v456 = vsub.f32 %v392, %v424
      %v457 = vsub.f32 %v393, %v425
      %v458 = vsub.f32 %v394, %v426
      %v459 = vsub.f32 %v395, %v427
      %v460 = vsub.f32 %v396, %v428
      %v461 = vsub.f32 %v397, %v429
      %v462 = vsub.f32 %v398, %v430
      %v463 = vsub.f32 %v399, %v431
      %v464 = vsub.f32 %v400, %v432
      %v465 = vsub.f32 %v401, %v433
      %v466 = vsub.f32 %v402, %v434
      %v467 = vsub.f32 %v403, %v435
      %v468 = vsub.f32 %v404, %v436
      %v469 = vsub.f32 %v405, %v437
      %v470 = vsub.f32 %v406, %v438
      %v471 = vsub.f32 %v407, %v439
      %v472 = vsub.f32 %v408, %v440
      %v473 = vsub.f32 %v409, %v441
      %v474 = vsub.f32 %v410, %v442
      %v475 = vsub.f32 %v411, %v443
      %v476 = vsub.f32 %v412, %v444
      %v477 = vsub.f32 %v413, %v445
      %v478 = vsub.f32 %v414, %v446
      %v479 = vsub.f32 %v415, %v447
      %v480 = vsub.f32 %v416, %v448
      %481 = vst [vmem:[#allocation2] sm:$0xff] %v449
      %482 = vst [vmem:[#allocation2 + $0x8] sm:$0xff] %v450
      %483 = vst [vmem:[#allocation2 + $0x10] sm:$0xff] %v451
      %484 = vst [vmem:[#allocation2 + $0x18] sm:$0xff] %v452
      %485 = vst [vmem:[#allocation2 + $0x20] sm:$0xff] %v453
      %486 = vst [vmem:[#allocation2 + $0x28] sm:$0xff] %v454
      %487 = vst [vmem:[#allocation2 + $0x30] sm:$0xff] %v455
      %488 = vst [vmem:[#allocation2 + $0x38] sm:$0xff] %v456
      %489 = vst [vmem:[#allocation2 + $0x40] sm:$0xff] %v457
      %490 = vst [vmem:[#allocation2 + $0x48] sm:$0xff] %v458
      %491 = vst [vmem:[#allocation2 + $0x50] sm:$0xff] %v459
      %492 = vst [vmem:[#allocation2 + $0x58] sm:$0xff] %v460
      %493 = vst [vmem:[#allocation2 + $0x60] sm:$0xff] %v461
      %494 = vst [vmem:[#allocation2 + $0x68] sm:$0xff] %v462
      %495 = vst [vmem:[#allocation2 + $0x70] sm:$0xff] %v463
      %496 = vst [vmem:[#allocation2 + $0x78] sm:$0xff] %v464
      %497 = vst [vmem:[#allocation2 + $0x80] sm:$0xff] %v465
      %498 = vst [vmem:[#allocation2 + $0x88] sm:$0xff] %v466
      %499 = vst [vmem:[#allocation2 + $0x90] sm:$0xff] %v467
      %500 = vst [vmem:[#allocation2 + $0x98] sm:$0xff] %v468
      %501 = vst [vmem:[#allocation2 + $0xa0] sm:$0xff] %v469
      %502 = vst [vmem:[#allocation2 + $0xa8] sm:$0xff] %v470
      %503 = vst [vmem:[#allocation2 + $0xb0] sm:$0xff] %v471
      %504 = vst [vmem:[#allocation2 + $0xb8] sm:$0xff] %v472
      %505 = vst [vmem:[#allocation2 + $0xc0] sm:$0xff] %v473
      %506 = vst [vmem:[#allocation2 + $0xc8] sm:$0xff] %v474
      %507 = vst [vmem:[#allocation2 + $0xd0] sm:$0xff] %v475
      %508 = vst [vmem:[#allocation2 + $0xd8] sm:$0xff] %v476
      %509 = vst [vmem:[#allocation2 + $0xe0] sm:$0xff] %v477
      %510 = vst [vmem:[#allocation2 + $0xe8] sm:$0xff] %v478
      %511 = vst [vmem:[#allocation2 + $0xf0] sm:$0xff] %v479
      %512 = vst [vmem:[#allocation2 + $0xf8] sm:$0xff] %v480
    $region25: #{tpu_custom_call.1} parent=1 // pred_fallthru
      _
    // Predicated region
    $region26: #{tpu_custom_call.1} parent=1 // pred_check
      %p513 = pneg %p40
    $region27: #{tpu_custom_call.1} parent=1 // pred_check_branch
      %515 = sbr.rel (%p513) target = $region29
    $region28: #{tpu_custom_call.1} parent=1 // pred_region
      %v516 = vld [vmem:[#allocation2] sm:$0xff]
      %v517 = vld [vmem:[#allocation2 + $0x8] sm:$0xff]
      %v518 = vld [vmem:[#allocation2 + $0x10] sm:$0xff]
      %v519 = vld [vmem:[#allocation2 + $0x18] sm:$0xff]
      %v520 = vld [vmem:[#allocation2 + $0x20] sm:$0xff]
      %v521 = vld [vmem:[#allocation2 + $0x28] sm:$0xff]
      %v522 = vld [vmem:[#allocation2 + $0x30] sm:$0xff]
      %v523 = vld [vmem:[#allocation2 + $0x38] sm:$0xff]
      %v524 = vld [vmem:[#allocation2 + $0x40] sm:$0xff]
      %v525 = vld [vmem:[#allocation2 + $0x48] sm:$0xff]
      %v526 = vld [vmem:[#allocation2 + $0x50] sm:$0xff]
      %v527 = vld [vmem:[#allocation2 + $0x58] sm:$0xff]
      %v528 = vld [vmem:[#allocation2 + $0x60] sm:$0xff]
      %v529 = vld [vmem:[#allocation2 + $0x68] sm:$0xff]
      %v530 = vld [vmem:[#allocation2 + $0x70] sm:$0xff]
      %v531 = vld [vmem:[#allocation2 + $0x78] sm:$0xff]
      %v532 = vld [vmem:[#allocation2 + $0x80] sm:$0xff]
      %v533 = vld [vmem:[#allocation2 + $0x88] sm:$0xff]
      %v534 = vld [vmem:[#allocation2 + $0x90] sm:$0xff]
      %v535 = vld [vmem:[#allocation2 + $0x98] sm:$0xff]
      %v536 = vld [vmem:[#allocation2 + $0xa0] sm:$0xff]
      %v537 = vld [vmem:[#allocation2 + $0xa8] sm:$0xff]
      %v538 = vld [vmem:[#allocation2 + $0xb0] sm:$0xff]
      %v539 = vld [vmem:[#allocation2 + $0xb8] sm:$0xff]
      %v540 = vld [vmem:[#allocation2 + $0xc0] sm:$0xff]
      %v541 = vld [vmem:[#allocation2 + $0xc8] sm:$0xff]
      %v542 = vld [vmem:[#allocation2 + $0xd0] sm:$0xff]
      %v543 = vld [vmem:[#allocation2 + $0xd8] sm:$0xff]
      %v544 = vld [vmem:[#allocation2 + $0xe0] sm:$0xff]
      %v545 = vld [vmem:[#allocation2 + $0xe8] sm:$0xff]
      %v546 = vld [vmem:[#allocation2 + $0xf0] sm:$0xff]
      %v547 = vld [vmem:[#allocation2 + $0xf8] sm:$0xff]
      %v548 = vmul.f32 %v516, %v516
      %v549 = vmul.f32 %v517, %v517
      %v550 = vmul.f32 %v518, %v518
      %v551 = vmul.f32 %v519, %v519
      %v552 = vmul.f32 %v520, %v520
      %v553 = vmul.f32 %v521, %v521
      %v554 = vmul.f32 %v522, %v522
      %v555 = vmul.f32 %v523, %v523
      %v556 = vmul.f32 %v524, %v524
      %v557 = vmul.f32 %v525, %v525
      %v558 = vmul.f32 %v526, %v526
      %v559 = vmul.f32 %v527, %v527
      %v560 = vmul.f32 %v528, %v528
      %v561 = vmul.f32 %v529, %v529
      %v562 = vmul.f32 %v530, %v530
      %v563 = vmul.f32 %v531, %v531
      %v564 = vmul.f32 %v532, %v532
      %v565 = vmul.f32 %v533, %v533
      %v566 = vmul.f32 %v534, %v534
      %v567 = vmul.f32 %v535, %v535
      %v568 = vmul.f32 %v536, %v536
      %v569 = vmul.f32 %v537, %v537
      %v570 = vmul.f32 %v538, %v538
      %v571 = vmul.f32 %v539, %v539
      %v572 = vmul.f32 %v540, %v540
      %v573 = vmul.f32 %v541, %v541
      %v574 = vmul.f32 %v542, %v542
      %v575 = vmul.f32 %v543, %v543
      %v576 = vmul.f32 %v544, %v544
      %v577 = vmul.f32 %v545, %v545
      %v578 = vmul.f32 %v546, %v546
      %v579 = vmul.f32 %v547, %v547
      %v580 = vcombine.high %v548, 0.0
      %v582 = vunpack.c.l.s4 1983009808
      %v583 = vunpack.c.0.s8 %v582
      %v584 = vlaneseq
      %v585 = vshrl.u32 %v584, 7
      %v586 = vsub.s32 %v583, %v585
      %v587 = vrot.slane %v548, %v586
      %v589 = vunpack.c.l.s4 1983009808
      %v590 = vunpack.c.0.s8 %v589
      %v591 = vlaneseq
      %v592 = vshrl.u32 %v591, 7
      %v593 = vsub.s32 %v590, %v592
      %v594 = vrot.slane %v580, %v593
      %v595 = vcombine.high %v549, 0.0
      %v597 = vunpack.c.l.s4 1983009808
      %v598 = vunpack.c.0.s8 %v597
      %v599 = vlaneseq
      %v600 = vshrl.u32 %v599, 7
      %v601 = vsub.s32 %v598, %v600
      %v602 = vrot.slane %v549, %v601
      %v604 = vunpack.c.l.s4 1983009808
      %v605 = vunpack.c.0.s8 %v604
      %v606 = vlaneseq
      %v607 = vshrl.u32 %v606, 7
      %v608 = vsub.s32 %v605, %v607
      %v609 = vrot.slane %v595, %v608
      %v610 = vcombine.low %v587, %v602
      %v611 = vcombine.high %v587, %v602
      %v613 = vunpack.c.l.s4 1934713408
      %v614 = vunpack.c.0.s8 %v613
      %v615 = vlaneseq
      %v616 = vshrl.u32 %v615, 7
      %v617 = vsub.s32 %v614, %v616
      %v618 = vrot.slane %v610, %v617
      %v620 = vunpack.c.l.s4 1934713408
      %v621 = vunpack.c.0.s8 %v620
      %v622 = vlaneseq
      %v623 = vshrl.u32 %v622, 7
      %v624 = vsub.s32 %v621, %v623
      %v625 = vrot.slane %v611, %v624
      %v626 = vcombine.low %v594, %v609
      %v627 = vcombine.high %v594, %v609
      %v629 = vunpack.c.l.s4 1934713408
      %v630 = vunpack.c.0.s8 %v629
      %v631 = vlaneseq
      %v632 = vshrl.u32 %v631, 7
      %v633 = vsub.s32 %v630, %v632
      %v634 = vrot.slane %v626, %v633
      %v636 = vunpack.c.l.s4 1934713408
      %v637 = vunpack.c.0.s8 %v636
      %v638 = vlaneseq
      %v639 = vshrl.u32 %v638, 7
      %v640 = vsub.s32 %v637, %v639
      %v641 = vrot.slane %v627, %v640
      %v642 = vcombine.high %v618, 0.0
      %v643 = vcombine.high %v625, 0.0
      %v644 = vcombine.high %v634, 0.0
      %v645 = vcombine.high %v641, 0.0
      %v646 = vcombine.high %v550, 0.0
      %v648 = vunpack.c.l.s4 1983009808
      %v649 = vunpack.c.0.s8 %v648
      %v650 = vlaneseq
      %v651 = vshrl.u32 %v650, 7
      %v652 = vsub.s32 %v649, %v651
      %v653 = vrot.slane %v550, %v652
      %v655 = vunpack.c.l.s4 1983009808
      %v656 = vunpack.c.0.s8 %v655
      %v657 = vlaneseq
      %v658 = vshrl.u32 %v657, 7
      %v659 = vsub.s32 %v656, %v658
      %v660 = vrot.slane %v646, %v659
      %v661 = vcombine.high %v551, 0.0
      %v663 = vunpack.c.l.s4 1983009808
      %v664 = vunpack.c.0.s8 %v663
      %v665 = vlaneseq
      %v666 = vshrl.u32 %v665, 7
      %v667 = vsub.s32 %v664, %v666
      %v668 = vrot.slane %v551, %v667
      %v670 = vunpack.c.l.s4 1983009808
      %v671 = vunpack.c.0.s8 %v670
      %v672 = vlaneseq
      %v673 = vshrl.u32 %v672, 7
      %v674 = vsub.s32 %v671, %v673
      %v675 = vrot.slane %v661, %v674
      %v676 = vcombine.low %v653, %v668
      %v677 = vcombine.high %v653, %v668
      %v679 = vunpack.c.l.s4 1934713408
      %v680 = vunpack.c.0.s8 %v679
      %v681 = vlaneseq
      %v682 = vshrl.u32 %v681, 7
      %v683 = vsub.s32 %v680, %v682
      %v684 = vrot.slane %v676, %v683
      %v686 = vunpack.c.l.s4 1934713408
      %v687 = vunpack.c.0.s8 %v686
      %v688 = vlaneseq
      %v689 = vshrl.u32 %v688, 7
      %v690 = vsub.s32 %v687, %v689
      %v691 = vrot.slane %v677, %v690
      %v692 = vcombine.low %v660, %v675
      %v693 = vcombine.high %v660, %v675
      %v695 = vunpack.c.l.s4 1934713408
      %v696 = vunpack.c.0.s8 %v695
      %v697 = vlaneseq
      %v698 = vshrl.u32 %v697, 7
      %v699 = vsub.s32 %v696, %v698
      %v700 = vrot.slane %v692, %v699
      %v702 = vunpack.c.l.s4 1934713408
      %v703 = vunpack.c.0.s8 %v702
      %v704 = vlaneseq
      %v705 = vshrl.u32 %v704, 7
      %v706 = vsub.s32 %v703, %v705
      %v707 = vrot.slane %v693, %v706
      %v708 = vcombine.high %v684, 0.0
      %v709 = vcombine.high %v691, 0.0
      %v710 = vcombine.high %v700, 0.0
      %v711 = vcombine.high %v707, 0.0
      %v712 = vcombine.high %v552, 0.0
      %v714 = vunpack.c.l.s4 1983009808
      %v715 = vunpack.c.0.s8 %v714
      %v716 = vlaneseq
      %v717 = vshrl.u32 %v716, 7
      %v718 = vsub.s32 %v715, %v717
      %v719 = vrot.slane %v552, %v718
      %v721 = vunpack.c.l.s4 1983009808
      %v722 = vunpack.c.0.s8 %v721
      %v723 = vlaneseq
      %v724 = vshrl.u32 %v723, 7
      %v725 = vsub.s32 %v722, %v724
      %v726 = vrot.slane %v712, %v725
      %v727 = vcombine.high %v553, 0.0
      %v729 = vunpack.c.l.s4 1983009808
      %v730 = vunpack.c.0.s8 %v729
      %v731 = vlaneseq
      %v732 = vshrl.u32 %v731, 7
      %v733 = vsub.s32 %v730, %v732
      %v734 = vrot.slane %v553, %v733
      %v736 = vunpack.c.l.s4 1983009808
      %v737 = vunpack.c.0.s8 %v736
      %v738 = vlaneseq
      %v739 = vshrl.u32 %v738, 7
      %v740 = vsub.s32 %v737, %v739
      %v741 = vrot.slane %v727, %v740
      %v742 = vcombine.low %v719, %v734
      %v743 = vcombine.high %v719, %v734
      %v745 = vunpack.c.l.s4 1934713408
      %v746 = vunpack.c.0.s8 %v745
      %v747 = vlaneseq
      %v748 = vshrl.u32 %v747, 7
      %v749 = vsub.s32 %v746, %v748
      %v750 = vrot.slane %v742, %v749
      %v752 = vunpack.c.l.s4 1934713408
      %v753 = vunpack.c.0.s8 %v752
      %v754 = vlaneseq
      %v755 = vshrl.u32 %v754, 7
      %v756 = vsub.s32 %v753, %v755
      %v757 = vrot.slane %v743, %v756
      %v758 = vcombine.low %v726, %v741
      %v759 = vcombine.high %v726, %v741
      %v761 = vunpack.c.l.s4 1934713408
      %v762 = vunpack.c.0.s8 %v761
      %v763 = vlaneseq
      %v764 = vshrl.u32 %v763, 7
      %v765 = vsub.s32 %v762, %v764
      %v766 = vrot.slane %v758, %v765
      %v768 = vunpack.c.l.s4 1934713408
      %v769 = vunpack.c.0.s8 %v768
      %v770 = vlaneseq
      %v771 = vshrl.u32 %v770, 7
      %v772 = vsub.s32 %v769, %v771
      %v773 = vrot.slane %v759, %v772
      %v774 = vcombine.high %v750, 0.0
      %v775 = vcombine.high %v757, 0.0
      %v776 = vcombine.high %v766, 0.0
      %v777 = vcombine.high %v773, 0.0
      %v778 = vcombine.high %v554, 0.0
      %v780 = vunpack.c.l.s4 1983009808
      %v781 = vunpack.c.0.s8 %v780
      %v782 = vlaneseq
      %v783 = vshrl.u32 %v782, 7
      %v784 = vsub.s32 %v781, %v783
      %v785 = vrot.slane %v554, %v784
      %v787 = vunpack.c.l.s4 1983009808
      %v788 = vunpack.c.0.s8 %v787
      %v789 = vlaneseq
      %v790 = vshrl.u32 %v789, 7
      %v791 = vsub.s32 %v788, %v790
      %v792 = vrot.slane %v778, %v791
      %v793 = vcombine.high %v555, 0.0
      %v795 = vunpack.c.l.s4 1983009808
      %v796 = vunpack.c.0.s8 %v795
      %v797 = vlaneseq
      %v798 = vshrl.u32 %v797, 7
      %v799 = vsub.s32 %v796, %v798
      %v800 = vrot.slane %v555, %v799
      %v802 = vunpack.c.l.s4 1983009808
      %v803 = vunpack.c.0.s8 %v802
      %v804 = vlaneseq
      %v805 = vshrl.u32 %v804, 7
      %v806 = vsub.s32 %v803, %v805
      %v807 = vrot.slane %v793, %v806
      %v808 = vcombine.low %v785, %v800
      %v809 = vcombine.high %v785, %v800
      %v811 = vunpack.c.l.s4 1934713408
      %v812 = vunpack.c.0.s8 %v811
      %v813 = vlaneseq
      %v814 = vshrl.u32 %v813, 7
      %v815 = vsub.s32 %v812, %v814
      %v816 = vrot.slane %v808, %v815
      %v818 = vunpack.c.l.s4 1934713408
      %v819 = vunpack.c.0.s8 %v818
      %v820 = vlaneseq
      %v821 = vshrl.u32 %v820, 7
      %v822 = vsub.s32 %v819, %v821
      %v823 = vrot.slane %v809, %v822
      %v824 = vcombine.low %v792, %v807
      %v825 = vcombine.high %v792, %v807
      %v827 = vunpack.c.l.s4 1934713408
      %v828 = vunpack.c.0.s8 %v827
      %v829 = vlaneseq
      %v830 = vshrl.u32 %v829, 7
      %v831 = vsub.s32 %v828, %v830
      %v832 = vrot.slane %v824, %v831
      %v834 = vunpack.c.l.s4 1934713408
      %v835 = vunpack.c.0.s8 %v834
      %v836 = vlaneseq
      %v837 = vshrl.u32 %v836, 7
      %v838 = vsub.s32 %v835, %v837
      %v839 = vrot.slane %v825, %v838
      %v840 = vcombine.high %v816, 0.0
      %v841 = vcombine.high %v823, 0.0
      %v842 = vcombine.high %v832, 0.0
      %v843 = vcombine.high %v839, 0.0
      %v844 = vcombine.high %v556, 0.0
      %v846 = vunpack.c.l.s4 1983009808
      %v847 = vunpack.c.0.s8 %v846
      %v848 = vlaneseq
      %v849 = vshrl.u32 %v848, 7
      %v850 = vsub.s32 %v847, %v849
      %v851 = vrot.slane %v556, %v850
      %v853 = vunpack.c.l.s4 1983009808
      %v854 = vunpack.c.0.s8 %v853
      %v855 = vlaneseq
      %v856 = vshrl.u32 %v855, 7
      %v857 = vsub.s32 %v854, %v856
      %v858 = vrot.slane %v844, %v857
      %v859 = vcombine.high %v557, 0.0
      %v861 = vunpack.c.l.s4 1983009808
      %v862 = vunpack.c.0.s8 %v861
      %v863 = vlaneseq
      %v864 = vshrl.u32 %v863, 7
      %v865 = vsub.s32 %v862, %v864
      %v866 = vrot.slane %v557, %v865
      %v868 = vunpack.c.l.s4 1983009808
      %v869 = vunpack.c.0.s8 %v868
      %v870 = vlaneseq
      %v871 = vshrl.u32 %v870, 7
      %v872 = vsub.s32 %v869, %v871
      %v873 = vrot.slane %v859, %v872
      %v874 = vcombine.low %v851, %v866
      %v875 = vcombine.high %v851, %v866
      %v877 = vunpack.c.l.s4 1934713408
      %v878 = vunpack.c.0.s8 %v877
      %v879 = vlaneseq
      %v880 = vshrl.u32 %v879, 7
      %v881 = vsub.s32 %v878, %v880
      %v882 = vrot.slane %v874, %v881
      %v884 = vunpack.c.l.s4 1934713408
      %v885 = vunpack.c.0.s8 %v884
      %v886 = vlaneseq
      %v887 = vshrl.u32 %v886, 7
      %v888 = vsub.s32 %v885, %v887
      %v889 = vrot.slane %v875, %v888
      %v890 = vcombine.low %v858, %v873
      %v891 = vcombine.high %v858, %v873
      %v893 = vunpack.c.l.s4 1934713408
      %v894 = vunpack.c.0.s8 %v893
      %v895 = vlaneseq
      %v896 = vshrl.u32 %v895, 7
      %v897 = vsub.s32 %v894, %v896
      %v898 = vrot.slane %v890, %v897
      %v900 = vunpack.c.l.s4 1934713408
      %v901 = vunpack.c.0.s8 %v900
      %v902 = vlaneseq
      %v903 = vshrl.u32 %v902, 7
      %v904 = vsub.s32 %v901, %v903
      %v905 = vrot.slane %v891, %v904
      %v906 = vcombine.high %v882, 0.0
      %v907 = vcombine.high %v889, 0.0
      %v908 = vcombine.high %v898, 0.0
      %v909 = vcombine.high %v905, 0.0
      %v910 = vcombine.high %v558, 0.0
      %v912 = vunpack.c.l.s4 1983009808
      %v913 = vunpack.c.0.s8 %v912
      %v914 = vlaneseq
      %v915 = vshrl.u32 %v914, 7
      %v916 = vsub.s32 %v913, %v915
      %v917 = vrot.slane %v558, %v916
      %v919 = vunpack.c.l.s4 1983009808
      %v920 = vunpack.c.0.s8 %v919
      %v921 = vlaneseq
      %v922 = vshrl.u32 %v921, 7
      %v923 = vsub.s32 %v920, %v922
      %v924 = vrot.slane %v910, %v923
      %v925 = vcombine.high %v559, 0.0
      %v927 = vunpack.c.l.s4 1983009808
      %v928 = vunpack.c.0.s8 %v927
      %v929 = vlaneseq
      %v930 = vshrl.u32 %v929, 7
      %v931 = vsub.s32 %v928, %v930
      %v932 = vrot.slane %v559, %v931
      %v934 = vunpack.c.l.s4 1983009808
      %v935 = vunpack.c.0.s8 %v934
      %v936 = vlaneseq
      %v937 = vshrl.u32 %v936, 7
      %v938 = vsub.s32 %v935, %v937
      %v939 = vrot.slane %v925, %v938
      %v940 = vcombine.low %v917, %v932
      %v941 = vcombine.high %v917, %v932
      %v943 = vunpack.c.l.s4 1934713408
      %v944 = vunpack.c.0.s8 %v943
      %v945 = vlaneseq
      %v946 = vshrl.u32 %v945, 7
      %v947 = vsub.s32 %v944, %v946
      %v948 = vrot.slane %v940, %v947
      %v950 = vunpack.c.l.s4 1934713408
      %v951 = vunpack.c.0.s8 %v950
      %v952 = vlaneseq
      %v953 = vshrl.u32 %v952, 7
      %v954 = vsub.s32 %v951, %v953
      %v955 = vrot.slane %v941, %v954
      %v956 = vcombine.low %v924, %v939
      %v957 = vcombine.high %v924, %v939
      %v959 = vunpack.c.l.s4 1934713408
      %v960 = vunpack.c.0.s8 %v959
      %v961 = vlaneseq
      %v962 = vshrl.u32 %v961, 7
      %v963 = vsub.s32 %v960, %v962
      %v964 = vrot.slane %v956, %v963
      %v966 = vunpack.c.l.s4 1934713408
      %v967 = vunpack.c.0.s8 %v966
      %v968 = vlaneseq
      %v969 = vshrl.u32 %v968, 7
      %v970 = vsub.s32 %v967, %v969
      %v971 = vrot.slane %v957, %v970
      %v972 = vcombine.high %v948, 0.0
      %v973 = vcombine.high %v955, 0.0
      %v974 = vcombine.high %v964, 0.0
      %v975 = vcombine.high %v971, 0.0
      %v976 = vcombine.high %v560, 0.0
      %v978 = vunpack.c.l.s4 1983009808
      %v979 = vunpack.c.0.s8 %v978
      %v980 = vlaneseq
      %v981 = vshrl.u32 %v980, 7
      %v982 = vsub.s32 %v979, %v981
      %v983 = vrot.slane %v560, %v982
      %v985 = vunpack.c.l.s4 1983009808
      %v986 = vunpack.c.0.s8 %v985
      %v987 = vlaneseq
      %v988 = vshrl.u32 %v987, 7
      %v989 = vsub.s32 %v986, %v988
      %v990 = vrot.slane %v976, %v989
      %v991 = vcombine.high %v561, 0.0
      %v993 = vunpack.c.l.s4 1983009808
      %v994 = vunpack.c.0.s8 %v993
      %v995 = vlaneseq
      %v996 = vshrl.u32 %v995, 7
      %v997 = vsub.s32 %v994, %v996
      %v998 = vrot.slane %v561, %v997
      %v1000 = vunpack.c.l.s4 1983009808
      %v1001 = vunpack.c.0.s8 %v1000
      %v1002 = vlaneseq
      %v1003 = vshrl.u32 %v1002, 7
      %v1004 = vsub.s32 %v1001, %v1003
      %v1005 = vrot.slane %v991, %v1004
      %v1006 = vcombine.low %v983, %v998
      %v1007 = vcombine.high %v983, %v998
      %v1009 = vunpack.c.l.s4 1934713408
      %v1010 = vunpack.c.0.s8 %v1009
      %v1011 = vlaneseq
      %v1012 = vshrl.u32 %v1011, 7
      %v1013 = vsub.s32 %v1010, %v1012
      %v1014 = vrot.slane %v1006, %v1013
      %v1016 = vunpack.c.l.s4 1934713408
      %v1017 = vunpack.c.0.s8 %v1016
      %v1018 = vlaneseq
      %v1019 = vshrl.u32 %v1018, 7
      %v1020 = vsub.s32 %v1017, %v1019
      %v1021 = vrot.slane %v1007, %v1020
      %v1022 = vcombine.low %v990, %v1005
      %v1023 = vcombine.high %v990, %v1005
      %v1025 = vunpack.c.l.s4 1934713408
      %v1026 = vunpack.c.0.s8 %v1025
      %v1027 = vlaneseq
      %v1028 = vshrl.u32 %v1027, 7
      %v1029 = vsub.s32 %v1026, %v1028
      %v1030 = vrot.slane %v1022, %v1029
      %v1032 = vunpack.c.l.s4 1934713408
      %v1033 = vunpack.c.0.s8 %v1032
      %v1034 = vlaneseq
      %v1035 = vshrl.u32 %v1034, 7
      %v1036 = vsub.s32 %v1033, %v1035
      %v1037 = vrot.slane %v1023, %v1036
      %v1038 = vcombine.high %v1014, 0.0
      %v1039 = vcombine.high %v1021, 0.0
      %v1040 = vcombine.high %v1030, 0.0
      %v1041 = vcombine.high %v1037, 0.0
      %v1042 = vcombine.high %v562, 0.0
      %v1044 = vunpack.c.l.s4 1983009808
      %v1045 = vunpack.c.0.s8 %v1044
      %v1046 = vlaneseq
      %v1047 = vshrl.u32 %v1046, 7
      %v1048 = vsub.s32 %v1045, %v1047
      %v1049 = vrot.slane %v562, %v1048
      %v1051 = vunpack.c.l.s4 1983009808
      %v1052 = vunpack.c.0.s8 %v1051
      %v1053 = vlaneseq
      %v1054 = vshrl.u32 %v1053, 7
      %v1055 = vsub.s32 %v1052, %v1054
      %v1056 = vrot.slane %v1042, %v1055
      %v1057 = vcombine.high %v563, 0.0
      %v1059 = vunpack.c.l.s4 1983009808
      %v1060 = vunpack.c.0.s8 %v1059
      %v1061 = vlaneseq
      %v1062 = vshrl.u32 %v1061, 7
      %v1063 = vsub.s32 %v1060, %v1062
      %v1064 = vrot.slane %v563, %v1063
      %v1066 = vunpack.c.l.s4 1983009808
      %v1067 = vunpack.c.0.s8 %v1066
      %v1068 = vlaneseq
      %v1069 = vshrl.u32 %v1068, 7
      %v1070 = vsub.s32 %v1067, %v1069
      %v1071 = vrot.slane %v1057, %v1070
      %v1072 = vcombine.low %v1049, %v1064
      %v1073 = vcombine.high %v1049, %v1064
      %v1075 = vunpack.c.l.s4 1934713408
      %v1076 = vunpack.c.0.s8 %v1075
      %v1077 = vlaneseq
      %v1078 = vshrl.u32 %v1077, 7
      %v1079 = vsub.s32 %v1076, %v1078
      %v1080 = vrot.slane %v1072, %v1079
      %v1082 = vunpack.c.l.s4 1934713408
      %v1083 = vunpack.c.0.s8 %v1082
      %v1084 = vlaneseq
      %v1085 = vshrl.u32 %v1084, 7
      %v1086 = vsub.s32 %v1083, %v1085
      %v1087 = vrot.slane %v1073, %v1086
      %v1088 = vcombine.low %v1056, %v1071
      %v1089 = vcombine.high %v1056, %v1071
      %v1091 = vunpack.c.l.s4 1934713408
      %v1092 = vunpack.c.0.s8 %v1091
      %v1093 = vlaneseq
      %v1094 = vshrl.u32 %v1093, 7
      %v1095 = vsub.s32 %v1092, %v1094
      %v1096 = vrot.slane %v1088, %v1095
      %v1098 = vunpack.c.l.s4 1934713408
      %v1099 = vunpack.c.0.s8 %v1098
      %v1100 = vlaneseq
      %v1101 = vshrl.u32 %v1100, 7
      %v1102 = vsub.s32 %v1099, %v1101
      %v1103 = vrot.slane %v1089, %v1102
      %v1104 = vcombine.high %v1080, 0.0
      %v1105 = vcombine.high %v1087, 0.0
      %v1106 = vcombine.high %v1096, 0.0
      %v1107 = vcombine.high %v1103, 0.0
      %v1108 = vcombine.high %v564, 0.0
      %v1110 = vunpack.c.l.s4 1983009808
      %v1111 = vunpack.c.0.s8 %v1110
      %v1112 = vlaneseq
      %v1113 = vshrl.u32 %v1112, 7
      %v1114 = vsub.s32 %v1111, %v1113
      %v1115 = vrot.slane %v564, %v1114
      %v1117 = vunpack.c.l.s4 1983009808
      %v1118 = vunpack.c.0.s8 %v1117
      %v1119 = vlaneseq
      %v1120 = vshrl.u32 %v1119, 7
      %v1121 = vsub.s32 %v1118, %v1120
      %v1122 = vrot.slane %v1108, %v1121
      %v1123 = vcombine.high %v565, 0.0
      %v1125 = vunpack.c.l.s4 1983009808
      %v1126 = vunpack.c.0.s8 %v1125
      %v1127 = vlaneseq
      %v1128 = vshrl.u32 %v1127, 7
      %v1129 = vsub.s32 %v1126, %v1128
      %v1130 = vrot.slane %v565, %v1129
      %v1132 = vunpack.c.l.s4 1983009808
      %v1133 = vunpack.c.0.s8 %v1132
      %v1134 = vlaneseq
      %v1135 = vshrl.u32 %v1134, 7
      %v1136 = vsub.s32 %v1133, %v1135
      %v1137 = vrot.slane %v1123, %v1136
      %v1138 = vcombine.low %v1115, %v1130
      %v1139 = vcombine.high %v1115, %v1130
      %v1141 = vunpack.c.l.s4 1934713408
      %v1142 = vunpack.c.0.s8 %v1141
      %v1143 = vlaneseq
      %v1144 = vshrl.u32 %v1143, 7
      %v1145 = vsub.s32 %v1142, %v1144
      %v1146 = vrot.slane %v1138, %v1145
      %v1148 = vunpack.c.l.s4 1934713408
      %v1149 = vunpack.c.0.s8 %v1148
      %v1150 = vlaneseq
      %v1151 = vshrl.u32 %v1150, 7
      %v1152 = vsub.s32 %v1149, %v1151
      %v1153 = vrot.slane %v1139, %v1152
      %v1154 = vcombine.low %v1122, %v1137
      %v1155 = vcombine.high %v1122, %v1137
      %v1157 = vunpack.c.l.s4 1934713408
      %v1158 = vunpack.c.0.s8 %v1157
      %v1159 = vlaneseq
      %v1160 = vshrl.u32 %v1159, 7
      %v1161 = vsub.s32 %v1158, %v1160
      %v1162 = vrot.slane %v1154, %v1161
      %v1164 = vunpack.c.l.s4 1934713408
      %v1165 = vunpack.c.0.s8 %v1164
      %v1166 = vlaneseq
      %v1167 = vshrl.u32 %v1166, 7
      %v1168 = vsub.s32 %v1165, %v1167
      %v1169 = vrot.slane %v1155, %v1168
      %v1170 = vcombine.high %v1146, 0.0
      %v1171 = vcombine.high %v1153, 0.0
      %v1172 = vcombine.high %v1162, 0.0
      %v1173 = vcombine.high %v1169, 0.0
      %v1174 = vcombine.high %v566, 0.0
      %v1176 = vunpack.c.l.s4 1983009808
      %v1177 = vunpack.c.0.s8 %v1176
      %v1178 = vlaneseq
      %v1179 = vshrl.u32 %v1178, 7
      %v1180 = vsub.s32 %v1177, %v1179
      %v1181 = vrot.slane %v566, %v1180
      %v1183 = vunpack.c.l.s4 1983009808
      %v1184 = vunpack.c.0.s8 %v1183
      %v1185 = vlaneseq
      %v1186 = vshrl.u32 %v1185, 7
      %v1187 = vsub.s32 %v1184, %v1186
      %v1188 = vrot.slane %v1174, %v1187
      %v1189 = vcombine.high %v567, 0.0
      %v1191 = vunpack.c.l.s4 1983009808
      %v1192 = vunpack.c.0.s8 %v1191
      %v1193 = vlaneseq
      %v1194 = vshrl.u32 %v1193, 7
      %v1195 = vsub.s32 %v1192, %v1194
      %v1196 = vrot.slane %v567, %v1195
      %v1198 = vunpack.c.l.s4 1983009808
      %v1199 = vunpack.c.0.s8 %v1198
      %v1200 = vlaneseq
      %v1201 = vshrl.u32 %v1200, 7
      %v1202 = vsub.s32 %v1199, %v1201
      %v1203 = vrot.slane %v1189, %v1202
      %v1204 = vcombine.low %v1181, %v1196
      %v1205 = vcombine.high %v1181, %v1196
      %v1207 = vunpack.c.l.s4 1934713408
      %v1208 = vunpack.c.0.s8 %v1207
      %v1209 = vlaneseq
      %v1210 = vshrl.u32 %v1209, 7
      %v1211 = vsub.s32 %v1208, %v1210
      %v1212 = vrot.slane %v1204, %v1211
      %v1214 = vunpack.c.l.s4 1934713408
      %v1215 = vunpack.c.0.s8 %v1214
      %v1216 = vlaneseq
      %v1217 = vshrl.u32 %v1216, 7
      %v1218 = vsub.s32 %v1215, %v1217
      %v1219 = vrot.slane %v1205, %v1218
      %v1220 = vcombine.low %v1188, %v1203
      %v1221 = vcombine.high %v1188, %v1203
      %v1223 = vunpack.c.l.s4 1934713408
      %v1224 = vunpack.c.0.s8 %v1223
      %v1225 = vlaneseq
      %v1226 = vshrl.u32 %v1225, 7
      %v1227 = vsub.s32 %v1224, %v1226
      %v1228 = vrot.slane %v1220, %v1227
      %v1230 = vunpack.c.l.s4 1934713408
      %v1231 = vunpack.c.0.s8 %v1230
      %v1232 = vlaneseq
      %v1233 = vshrl.u32 %v1232, 7
      %v1234 = vsub.s32 %v1231, %v1233
      %v1235 = vrot.slane %v1221, %v1234
      %v1236 = vcombine.high %v1212, 0.0
      %v1237 = vcombine.high %v1219, 0.0
      %v1238 = vcombine.high %v1228, 0.0
      %v1239 = vcombine.high %v1235, 0.0
      %v1240 = vcombine.high %v568, 0.0
      %v1242 = vunpack.c.l.s4 1983009808
      %v1243 = vunpack.c.0.s8 %v1242
      %v1244 = vlaneseq
      %v1245 = vshrl.u32 %v1244, 7
      %v1246 = vsub.s32 %v1243, %v1245
      %v1247 = vrot.slane %v568, %v1246
      %v1249 = vunpack.c.l.s4 1983009808
      %v1250 = vunpack.c.0.s8 %v1249
      %v1251 = vlaneseq
      %v1252 = vshrl.u32 %v1251, 7
      %v1253 = vsub.s32 %v1250, %v1252
      %v1254 = vrot.slane %v1240, %v1253
      %v1255 = vcombine.high %v569, 0.0
      %v1257 = vunpack.c.l.s4 1983009808
      %v1258 = vunpack.c.0.s8 %v1257
      %v1259 = vlaneseq
      %v1260 = vshrl.u32 %v1259, 7
      %v1261 = vsub.s32 %v1258, %v1260
      %v1262 = vrot.slane %v569, %v1261
      %v1264 = vunpack.c.l.s4 1983009808
      %v1265 = vunpack.c.0.s8 %v1264
      %v1266 = vlaneseq
      %v1267 = vshrl.u32 %v1266, 7
      %v1268 = vsub.s32 %v1265, %v1267
      %v1269 = vrot.slane %v1255, %v1268
      %v1270 = vcombine.low %v1247, %v1262
      %v1271 = vcombine.high %v1247, %v1262
      %v1273 = vunpack.c.l.s4 1934713408
      %v1274 = vunpack.c.0.s8 %v1273
      %v1275 = vlaneseq
      %v1276 = vshrl.u32 %v1275, 7
      %v1277 = vsub.s32 %v1274, %v1276
      %v1278 = vrot.slane %v1270, %v1277
      %v1280 = vunpack.c.l.s4 1934713408
      %v1281 = vunpack.c.0.s8 %v1280
      %v1282 = vlaneseq
      %v1283 = vshrl.u32 %v1282, 7
      %v1284 = vsub.s32 %v1281, %v1283
      %v1285 = vrot.slane %v1271, %v1284
      %v1286 = vcombine.low %v1254, %v1269
      %v1287 = vcombine.high %v1254, %v1269
      %v1289 = vunpack.c.l.s4 1934713408
      %v1290 = vunpack.c.0.s8 %v1289
      %v1291 = vlaneseq
      %v1292 = vshrl.u32 %v1291, 7
      %v1293 = vsub.s32 %v1290, %v1292
      %v1294 = vrot.slane %v1286, %v1293
      %v1296 = vunpack.c.l.s4 1934713408
      %v1297 = vunpack.c.0.s8 %v1296
      %v1298 = vlaneseq
      %v1299 = vshrl.u32 %v1298, 7
      %v1300 = vsub.s32 %v1297, %v1299
      %v1301 = vrot.slane %v1287, %v1300
      %v1302 = vcombine.high %v1278, 0.0
      %v1303 = vcombine.high %v1285, 0.0
      %v1304 = vcombine.high %v1294, 0.0
      %v1305 = vcombine.high %v1301, 0.0
      %v1306 = vcombine.high %v570, 0.0
      %v1308 = vunpack.c.l.s4 1983009808
      %v1309 = vunpack.c.0.s8 %v1308
      %v1310 = vlaneseq
      %v1311 = vshrl.u32 %v1310, 7
      %v1312 = vsub.s32 %v1309, %v1311
      %v1313 = vrot.slane %v570, %v1312
      %v1315 = vunpack.c.l.s4 1983009808
      %v1316 = vunpack.c.0.s8 %v1315
      %v1317 = vlaneseq
      %v1318 = vshrl.u32 %v1317, 7
      %v1319 = vsub.s32 %v1316, %v1318
      %v1320 = vrot.slane %v1306, %v1319
      %v1321 = vcombine.high %v571, 0.0
      %v1323 = vunpack.c.l.s4 1983009808
      %v1324 = vunpack.c.0.s8 %v1323
      %v1325 = vlaneseq
      %v1326 = vshrl.u32 %v1325, 7
      %v1327 = vsub.s32 %v1324, %v1326
      %v1328 = vrot.slane %v571, %v1327
      %v1330 = vunpack.c.l.s4 1983009808
      %v1331 = vunpack.c.0.s8 %v1330
      %v1332 = vlaneseq
      %v1333 = vshrl.u32 %v1332, 7
      %v1334 = vsub.s32 %v1331, %v1333
      %v1335 = vrot.slane %v1321, %v1334
      %v1336 = vcombine.low %v1313, %v1328
      %v1337 = vcombine.high %v1313, %v1328
      %v1339 = vunpack.c.l.s4 1934713408
      %v1340 = vunpack.c.0.s8 %v1339
      %v1341 = vlaneseq
      %v1342 = vshrl.u32 %v1341, 7
      %v1343 = vsub.s32 %v1340, %v1342
      %v1344 = vrot.slane %v1336, %v1343
      %v1346 = vunpack.c.l.s4 1934713408
      %v1347 = vunpack.c.0.s8 %v1346
      %v1348 = vlaneseq
      %v1349 = vshrl.u32 %v1348, 7
      %v1350 = vsub.s32 %v1347, %v1349
      %v1351 = vrot.slane %v1337, %v1350
      %v1352 = vcombine.low %v1320, %v1335
      %v1353 = vcombine.high %v1320, %v1335
      %v1355 = vunpack.c.l.s4 1934713408
      %v1356 = vunpack.c.0.s8 %v1355
      %v1357 = vlaneseq
      %v1358 = vshrl.u32 %v1357, 7
      %v1359 = vsub.s32 %v1356, %v1358
      %v1360 = vrot.slane %v1352, %v1359
      %v1362 = vunpack.c.l.s4 1934713408
      %v1363 = vunpack.c.0.s8 %v1362
      %v1364 = vlaneseq
      %v1365 = vshrl.u32 %v1364, 7
      %v1366 = vsub.s32 %v1363, %v1365
      %v1367 = vrot.slane %v1353, %v1366
      %v1368 = vcombine.high %v1344, 0.0
      %v1369 = vcombine.high %v1351, 0.0
      %v1370 = vcombine.high %v1360, 0.0
      %v1371 = vcombine.high %v1367, 0.0
      %v1372 = vcombine.high %v572, 0.0
      %v1374 = vunpack.c.l.s4 1983009808
      %v1375 = vunpack.c.0.s8 %v1374
      %v1376 = vlaneseq
      %v1377 = vshrl.u32 %v1376, 7
      %v1378 = vsub.s32 %v1375, %v1377
      %v1379 = vrot.slane %v572, %v1378
      %v1381 = vunpack.c.l.s4 1983009808
      %v1382 = vunpack.c.0.s8 %v1381
      %v1383 = vlaneseq
      %v1384 = vshrl.u32 %v1383, 7
      %v1385 = vsub.s32 %v1382, %v1384
      %v1386 = vrot.slane %v1372, %v1385
      %v1387 = vcombine.high %v573, 0.0
      %v1389 = vunpack.c.l.s4 1983009808
      %v1390 = vunpack.c.0.s8 %v1389
      %v1391 = vlaneseq
      %v1392 = vshrl.u32 %v1391, 7
      %v1393 = vsub.s32 %v1390, %v1392
      %v1394 = vrot.slane %v573, %v1393
      %v1396 = vunpack.c.l.s4 1983009808
      %v1397 = vunpack.c.0.s8 %v1396
      %v1398 = vlaneseq
      %v1399 = vshrl.u32 %v1398, 7
      %v1400 = vsub.s32 %v1397, %v1399
      %v1401 = vrot.slane %v1387, %v1400
      %v1402 = vcombine.low %v1379, %v1394
      %v1403 = vcombine.high %v1379, %v1394
      %v1405 = vunpack.c.l.s4 1934713408
      %v1406 = vunpack.c.0.s8 %v1405
      %v1407 = vlaneseq
      %v1408 = vshrl.u32 %v1407, 7
      %v1409 = vsub.s32 %v1406, %v1408
      %v1410 = vrot.slane %v1402, %v1409
      %v1412 = vunpack.c.l.s4 1934713408
      %v1413 = vunpack.c.0.s8 %v1412
      %v1414 = vlaneseq
      %v1415 = vshrl.u32 %v1414, 7
      %v1416 = vsub.s32 %v1413, %v1415
      %v1417 = vrot.slane %v1403, %v1416
      %v1418 = vcombine.low %v1386, %v1401
      %v1419 = vcombine.high %v1386, %v1401
      %v1421 = vunpack.c.l.s4 1934713408
      %v1422 = vunpack.c.0.s8 %v1421
      %v1423 = vlaneseq
      %v1424 = vshrl.u32 %v1423, 7
      %v1425 = vsub.s32 %v1422, %v1424
      %v1426 = vrot.slane %v1418, %v1425
      %v1428 = vunpack.c.l.s4 1934713408
      %v1429 = vunpack.c.0.s8 %v1428
      %v1430 = vlaneseq
      %v1431 = vshrl.u32 %v1430, 7
      %v1432 = vsub.s32 %v1429, %v1431
      %v1433 = vrot.slane %v1419, %v1432
      %v1434 = vcombine.high %v1410, 0.0
      %v1435 = vcombine.high %v1417, 0.0
      %v1436 = vcombine.high %v1426, 0.0
      %v1437 = vcombine.high %v1433, 0.0
      %v1438 = vcombine.high %v574, 0.0
      %v1440 = vunpack.c.l.s4 1983009808
      %v1441 = vunpack.c.0.s8 %v1440
      %v1442 = vlaneseq
      %v1443 = vshrl.u32 %v1442, 7
      %v1444 = vsub.s32 %v1441, %v1443
      %v1445 = vrot.slane %v574, %v1444
      %v1447 = vunpack.c.l.s4 1983009808
      %v1448 = vunpack.c.0.s8 %v1447
      %v1449 = vlaneseq
      %v1450 = vshrl.u32 %v1449, 7
      %v1451 = vsub.s32 %v1448, %v1450
      %v1452 = vrot.slane %v1438, %v1451
      %v1453 = vcombine.high %v575, 0.0
      %v1455 = vunpack.c.l.s4 1983009808
      %v1456 = vunpack.c.0.s8 %v1455
      %v1457 = vlaneseq
      %v1458 = vshrl.u32 %v1457, 7
      %v1459 = vsub.s32 %v1456, %v1458
      %v1460 = vrot.slane %v575, %v1459
      %v1462 = vunpack.c.l.s4 1983009808
      %v1463 = vunpack.c.0.s8 %v1462
      %v1464 = vlaneseq
      %v1465 = vshrl.u32 %v1464, 7
      %v1466 = vsub.s32 %v1463, %v1465
      %v1467 = vrot.slane %v1453, %v1466
      %v1468 = vcombine.low %v1445, %v1460
      %v1469 = vcombine.high %v1445, %v1460
      %v1471 = vunpack.c.l.s4 1934713408
      %v1472 = vunpack.c.0.s8 %v1471
      %v1473 = vlaneseq
      %v1474 = vshrl.u32 %v1473, 7
      %v1475 = vsub.s32 %v1472, %v1474
      %v1476 = vrot.slane %v1468, %v1475
      %v1478 = vunpack.c.l.s4 1934713408
      %v1479 = vunpack.c.0.s8 %v1478
      %v1480 = vlaneseq
      %v1481 = vshrl.u32 %v1480, 7
      %v1482 = vsub.s32 %v1479, %v1481
      %v1483 = vrot.slane %v1469, %v1482
      %v1484 = vcombine.low %v1452, %v1467
      %v1485 = vcombine.high %v1452, %v1467
      %v1487 = vunpack.c.l.s4 1934713408
      %v1488 = vunpack.c.0.s8 %v1487
      %v1489 = vlaneseq
      %v1490 = vshrl.u32 %v1489, 7
      %v1491 = vsub.s32 %v1488, %v1490
      %v1492 = vrot.slane %v1484, %v1491
      %v1494 = vunpack.c.l.s4 1934713408
      %v1495 = vunpack.c.0.s8 %v1494
      %v1496 = vlaneseq
      %v1497 = vshrl.u32 %v1496, 7
      %v1498 = vsub.s32 %v1495, %v1497
      %v1499 = vrot.slane %v1485, %v1498
      %v1500 = vcombine.high %v1476, 0.0
      %v1501 = vcombine.high %v1483, 0.0
      %v1502 = vcombine.high %v1492, 0.0
      %v1503 = vcombine.high %v1499, 0.0
      %v1504 = vcombine.high %v576, 0.0
      %v1506 = vunpack.c.l.s4 1983009808
      %v1507 = vunpack.c.0.s8 %v1506
      %v1508 = vlaneseq
      %v1509 = vshrl.u32 %v1508, 7
      %v1510 = vsub.s32 %v1507, %v1509
      %v1511 = vrot.slane %v576, %v1510
      %v1513 = vunpack.c.l.s4 1983009808
      %v1514 = vunpack.c.0.s8 %v1513
      %v1515 = vlaneseq
      %v1516 = vshrl.u32 %v1515, 7
      %v1517 = vsub.s32 %v1514, %v1516
      %v1518 = vrot.slane %v1504, %v1517
      %v1519 = vcombine.high %v577, 0.0
      %v1521 = vunpack.c.l.s4 1983009808
      %v1522 = vunpack.c.0.s8 %v1521
      %v1523 = vlaneseq
      %v1524 = vshrl.u32 %v1523, 7
      %v1525 = vsub.s32 %v1522, %v1524
      %v1526 = vrot.slane %v577, %v1525
      %v1528 = vunpack.c.l.s4 1983009808
      %v1529 = vunpack.c.0.s8 %v1528
      %v1530 = vlaneseq
      %v1531 = vshrl.u32 %v1530, 7
      %v1532 = vsub.s32 %v1529, %v1531
      %v1533 = vrot.slane %v1519, %v1532
      %v1534 = vcombine.low %v1511, %v1526
      %v1535 = vcombine.high %v1511, %v1526
      %v1537 = vunpack.c.l.s4 1934713408
      %v1538 = vunpack.c.0.s8 %v1537
      %v1539 = vlaneseq
      %v1540 = vshrl.u32 %v1539, 7
      %v1541 = vsub.s32 %v1538, %v1540
      %v1542 = vrot.slane %v1534, %v1541
      %v1544 = vunpack.c.l.s4 1934713408
      %v1545 = vunpack.c.0.s8 %v1544
      %v1546 = vlaneseq
      %v1547 = vshrl.u32 %v1546, 7
      %v1548 = vsub.s32 %v1545, %v1547
      %v1549 = vrot.slane %v1535, %v1548
      %v1550 = vcombine.low %v1518, %v1533
      %v1551 = vcombine.high %v1518, %v1533
      %v1553 = vunpack.c.l.s4 1934713408
      %v1554 = vunpack.c.0.s8 %v1553
      %v1555 = vlaneseq
      %v1556 = vshrl.u32 %v1555, 7
      %v1557 = vsub.s32 %v1554, %v1556
      %v1558 = vrot.slane %v1550, %v1557
      %v1560 = vunpack.c.l.s4 1934713408
      %v1561 = vunpack.c.0.s8 %v1560
      %v1562 = vlaneseq
      %v1563 = vshrl.u32 %v1562, 7
      %v1564 = vsub.s32 %v1561, %v1563
      %v1565 = vrot.slane %v1551, %v1564
      %v1566 = vcombine.high %v1542, 0.0
      %v1567 = vcombine.high %v1549, 0.0
      %v1568 = vcombine.high %v1558, 0.0
      %v1569 = vcombine.high %v1565, 0.0
      %v1570 = vcombine.high %v578, 0.0
      %v1572 = vunpack.c.l.s4 1983009808
      %v1573 = vunpack.c.0.s8 %v1572
      %v1574 = vlaneseq
      %v1575 = vshrl.u32 %v1574, 7
      %v1576 = vsub.s32 %v1573, %v1575
      %v1577 = vrot.slane %v578, %v1576
      %v1579 = vunpack.c.l.s4 1983009808
      %v1580 = vunpack.c.0.s8 %v1579
      %v1581 = vlaneseq
      %v1582 = vshrl.u32 %v1581, 7
      %v1583 = vsub.s32 %v1580, %v1582
      %v1584 = vrot.slane %v1570, %v1583
      %v1585 = vcombine.high %v579, 0.0
      %v1587 = vunpack.c.l.s4 1983009808
      %v1588 = vunpack.c.0.s8 %v1587
      %v1589 = vlaneseq
      %v1590 = vshrl.u32 %v1589, 7
      %v1591 = vsub.s32 %v1588, %v1590
      %v1592 = vrot.slane %v579, %v1591
      %v1594 = vunpack.c.l.s4 1983009808
      %v1595 = vunpack.c.0.s8 %v1594
      %v1596 = vlaneseq
      %v1597 = vshrl.u32 %v1596, 7
      %v1598 = vsub.s32 %v1595, %v1597
      %v1599 = vrot.slane %v1585, %v1598
      %v1600 = vcombine.low %v1577, %v1592
      %v1601 = vcombine.high %v1577, %v1592
      %v1603 = vunpack.c.l.s4 1934713408
      %v1604 = vunpack.c.0.s8 %v1603
      %v1605 = vlaneseq
      %v1606 = vshrl.u32 %v1605, 7
      %v1607 = vsub.s32 %v1604, %v1606
      %v1608 = vrot.slane %v1600, %v1607
      %v1610 = vunpack.c.l.s4 1934713408
      %v1611 = vunpack.c.0.s8 %v1610
      %v1612 = vlaneseq
      %v1613 = vshrl.u32 %v1612, 7
      %v1614 = vsub.s32 %v1611, %v1613
      %v1615 = vrot.slane %v1601, %v1614
      %v1616 = vcombine.low %v1584, %v1599
      %v1617 = vcombine.high %v1584, %v1599
      %v1619 = vunpack.c.l.s4 1934713408
      %v1620 = vunpack.c.0.s8 %v1619
      %v1621 = vlaneseq
      %v1622 = vshrl.u32 %v1621, 7
      %v1623 = vsub.s32 %v1620, %v1622
      %v1624 = vrot.slane %v1616, %v1623
      %v1626 = vunpack.c.l.s4 1934713408
      %v1627 = vunpack.c.0.s8 %v1626
      %v1628 = vlaneseq
      %v1629 = vshrl.u32 %v1628, 7
      %v1630 = vsub.s32 %v1627, %v1629
      %v1631 = vrot.slane %v1617, %v1630
      %v1632 = vcombine.high %v1608, 0.0
      %v1633 = vcombine.high %v1615, 0.0
      %v1634 = vcombine.high %v1624, 0.0
      %v1635 = vcombine.high %v1631, 0.0
      %vm1636 = vcmask 1041408
      %v1637 = vsel %vm1636, %v618, 0.0
      %v1638 = vsel %vm1636, %v684, 0.0
      %v1639 = vadd.f32 %v1637, %v1638
      %v1640 = vsel %vm1636, %v750, 0.0
      %v1641 = vadd.f32 %v1639, %v1640
      %v1642 = vsel %vm1636, %v816, 0.0
      %v1643 = vadd.f32 %v1641, %v1642
      %v1644 = vsel %vm1636, %v882, 0.0
      %v1645 = vadd.f32 %v1643, %v1644
      %v1646 = vsel %vm1636, %v948, 0.0
      %v1647 = vadd.f32 %v1645, %v1646
      %v1648 = vsel %vm1636, %v1014, 0.0
      %v1649 = vadd.f32 %v1647, %v1648
      %v1650 = vsel %vm1636, %v1080, 0.0
      %v1651 = vadd.f32 %v1649, %v1650
      %v1652 = vsel %vm1636, %v1146, 0.0
      %v1653 = vadd.f32 %v1651, %v1652
      %v1654 = vsel %vm1636, %v1212, 0.0
      %v1655 = vadd.f32 %v1653, %v1654
      %v1656 = vsel %vm1636, %v1278, 0.0
      %v1657 = vadd.f32 %v1655, %v1656
      %v1658 = vsel %vm1636, %v1344, 0.0
      %v1659 = vadd.f32 %v1657, %v1658
      %v1660 = vsel %vm1636, %v1410, 0.0
      %v1661 = vadd.f32 %v1659, %v1660
      %v1662 = vsel %vm1636, %v1476, 0.0
      %v1663 = vadd.f32 %v1661, %v1662
      %v1664 = vsel %vm1636, %v1542, 0.0
      %v1665 = vadd.f32 %v1663, %v1664
      %v1666 = vsel %vm1636, %v1608, 0.0
      %v1667 = vadd.f32 %v1665, %v1666
      %v1668 = vrot.slane %v1667, 4
      %v1669 = vadd.f32 %v1667, %v1668
      %v1670 = vrot.slane %v1669, 2
      %v1671 = vadd.f32 %v1669, %v1670
      %v1672 = vrot.slane %v1671, 1
      %v1673 = vadd.f32 %v1671, %v1672
      %v1674 = vsel %vm1636, %v642, 0.0
      %v1675 = vsel %vm1636, %v708, 0.0
      %v1676 = vadd.f32 %v1674, %v1675
      %v1677 = vsel %vm1636, %v774, 0.0
      %v1678 = vadd.f32 %v1676, %v1677
      %v1679 = vsel %vm1636, %v840, 0.0
      %v1680 = vadd.f32 %v1678, %v1679
      %v1681 = vsel %vm1636, %v906, 0.0
      %v1682 = vadd.f32 %v1680, %v1681
      %v1683 = vsel %vm1636, %v972, 0.0
      %v1684 = vadd.f32 %v1682, %v1683
      %v1685 = vsel %vm1636, %v1038, 0.0
      %v1686 = vadd.f32 %v1684, %v1685
      %v1687 = vsel %vm1636, %v1104, 0.0
      %v1688 = vadd.f32 %v1686, %v1687
      %v1689 = vsel %vm1636, %v1170, 0.0
      %v1690 = vadd.f32 %v1688, %v1689
      %v1691 = vsel %vm1636, %v1236, 0.0
      %v1692 = vadd.f32 %v1690, %v1691
      %v1693 = vsel %vm1636, %v1302, 0.0
      %v1694 = vadd.f32 %v1692, %v1693
      %v1695 = vsel %vm1636, %v1368, 0.0
      %v1696 = vadd.f32 %v1694, %v1695
      %v1697 = vsel %vm1636, %v1434, 0.0
      %v1698 = vadd.f32 %v1696, %v1697
      %v1699 = vsel %vm1636, %v1500, 0.0
      %v1700 = vadd.f32 %v1698, %v1699
      %v1701 = vsel %vm1636, %v1566, 0.0
      %v1702 = vadd.f32 %v1700, %v1701
      %v1703 = vsel %vm1636, %v1632, 0.0
      %v1704 = vadd.f32 %v1702, %v1703
      %v1705 = vrot.slane %v1704, 4
      %v1706 = vadd.f32 %v1704, %v1705
      %v1707 = vrot.slane %v1706, 2
      %v1708 = vadd.f32 %v1706, %v1707
      %v1709 = vrot.slane %v1708, 1
      %v1710 = vadd.f32 %v1708, %v1709
      %v1711 = vsel %vm1636, %v625, 0.0
      %v1712 = vsel %vm1636, %v691, 0.0
      %v1713 = vadd.f32 %v1711, %v1712
      %v1714 = vsel %vm1636, %v757, 0.0
      %v1715 = vadd.f32 %v1713, %v1714
      %v1716 = vsel %vm1636, %v823, 0.0
      %v1717 = vadd.f32 %v1715, %v1716
      %v1718 = vsel %vm1636, %v889, 0.0
      %v1719 = vadd.f32 %v1717, %v1718
      %v1720 = vsel %vm1636, %v955, 0.0
      %v1721 = vadd.f32 %v1719, %v1720
      %v1722 = vsel %vm1636, %v1021, 0.0
      %v1723 = vadd.f32 %v1721, %v1722
      %v1724 = vsel %vm1636, %v1087, 0.0
      %v1725 = vadd.f32 %v1723, %v1724
      %v1726 = vsel %vm1636, %v1153, 0.0
      %v1727 = vadd.f32 %v1725, %v1726
      %v1728 = vsel %vm1636, %v1219, 0.0
      %v1729 = vadd.f32 %v1727, %v1728
      %v1730 = vsel %vm1636, %v1285, 0.0
      %v1731 = vadd.f32 %v1729, %v1730
      %v1732 = vsel %vm1636, %v1351, 0.0
      %v1733 = vadd.f32 %v1731, %v1732
      %v1734 = vsel %vm1636, %v1417, 0.0
      %v1735 = vadd.f32 %v1733, %v1734
      %v1736 = vsel %vm1636, %v1483, 0.0
      %v1737 = vadd.f32 %v1735, %v1736
      %v1738 = vsel %vm1636, %v1549, 0.0
      %v1739 = vadd.f32 %v1737, %v1738
      %v1740 = vsel %vm1636, %v1615, 0.0
      %v1741 = vadd.f32 %v1739, %v1740
      %v1742 = vrot.slane %v1741, 4
      %v1743 = vadd.f32 %v1741, %v1742
      %v1744 = vrot.slane %v1743, 2
      %v1745 = vadd.f32 %v1743, %v1744
      %v1746 = vrot.slane %v1745, 1
      %v1747 = vadd.f32 %v1745, %v1746
      %v1748 = vsel %vm1636, %v643, 0.0
      %v1749 = vsel %vm1636, %v709, 0.0
      %v1750 = vadd.f32 %v1748, %v1749
      %v1751 = vsel %vm1636, %v775, 0.0
      %v1752 = vadd.f32 %v1750, %v1751
      %v1753 = vsel %vm1636, %v841, 0.0
      %v1754 = vadd.f32 %v1752, %v1753
      %v1755 = vsel %vm1636, %v907, 0.0
      %v1756 = vadd.f32 %v1754, %v1755
      %v1757 = vsel %vm1636, %v973, 0.0
      %v1758 = vadd.f32 %v1756, %v1757
      %v1759 = vsel %vm1636, %v1039, 0.0
      %v1760 = vadd.f32 %v1758, %v1759
      %v1761 = vsel %vm1636, %v1105, 0.0
      %v1762 = vadd.f32 %v1760, %v1761
      %v1763 = vsel %vm1636, %v1171, 0.0
      %v1764 = vadd.f32 %v1762, %v1763
      %v1765 = vsel %vm1636, %v1237, 0.0
      %v1766 = vadd.f32 %v1764, %v1765
      %v1767 = vsel %vm1636, %v1303, 0.0
      %v1768 = vadd.f32 %v1766, %v1767
      %v1769 = vsel %vm1636, %v1369, 0.0
      %v1770 = vadd.f32 %v1768, %v1769
      %v1771 = vsel %vm1636, %v1435, 0.0
      %v1772 = vadd.f32 %v1770, %v1771
      %v1773 = vsel %vm1636, %v1501, 0.0
      %v1774 = vadd.f32 %v1772, %v1773
      %v1775 = vsel %vm1636, %v1567, 0.0
      %v1776 = vadd.f32 %v1774, %v1775
      %v1777 = vsel %vm1636, %v1633, 0.0
      %v1778 = vadd.f32 %v1776, %v1777
      %v1779 = vrot.slane %v1778, 4
      %v1780 = vadd.f32 %v1778, %v1779
      %v1781 = vrot.slane %v1780, 2
      %v1782 = vadd.f32 %v1780, %v1781
      %v1783 = vrot.slane %v1782, 1
      %v1784 = vadd.f32 %v1782, %v1783
      %v1785 = vsel %vm1636, %v634, 0.0
      %v1786 = vsel %vm1636, %v700, 0.0
      %v1787 = vadd.f32 %v1785, %v1786
      %v1788 = vsel %vm1636, %v766, 0.0
      %v1789 = vadd.f32 %v1787, %v1788
      %v1790 = vsel %vm1636, %v832, 0.0
      %v1791 = vadd.f32 %v1789, %v1790
      %v1792 = vsel %vm1636, %v898, 0.0
      %v1793 = vadd.f32 %v1791, %v1792
      %v1794 = vsel %vm1636, %v964, 0.0
      %v1795 = vadd.f32 %v1793, %v1794
      %v1796 = vsel %vm1636, %v1030, 0.0
      %v1797 = vadd.f32 %v1795, %v1796
      %v1798 = vsel %vm1636, %v1096, 0.0
      %v1799 = vadd.f32 %v1797, %v1798
      %v1800 = vsel %vm1636, %v1162, 0.0
      %v1801 = vadd.f32 %v1799, %v1800
      %v1802 = vsel %vm1636, %v1228, 0.0
      %v1803 = vadd.f32 %v1801, %v1802
      %v1804 = vsel %vm1636, %v1294, 0.0
      %v1805 = vadd.f32 %v1803, %v1804
      %v1806 = vsel %vm1636, %v1360, 0.0
      %v1807 = vadd.f32 %v1805, %v1806
      %v1808 = vsel %vm1636, %v1426, 0.0
      %v1809 = vadd.f32 %v1807, %v1808
      %v1810 = vsel %vm1636, %v1492, 0.0
      %v1811 = vadd.f32 %v1809, %v1810
      %v1812 = vsel %vm1636, %v1558, 0.0
      %v1813 = vadd.f32 %v1811, %v1812
      %v1814 = vsel %vm1636, %v1624, 0.0
      %v1815 = vadd.f32 %v1813, %v1814
      %v1816 = vrot.slane %v1815, 4
      %v1817 = vadd.f32 %v1815, %v1816
      %v1818 = vrot.slane %v1817, 2
      %v1819 = vadd.f32 %v1817, %v1818
      %v1820 = vrot.slane %v1819, 1
      %v1821 = vadd.f32 %v1819, %v1820
      %v1822 = vsel %vm1636, %v644, 0.0
      %v1823 = vsel %vm1636, %v710, 0.0
      %v1824 = vadd.f32 %v1822, %v1823
      %v1825 = vsel %vm1636, %v776, 0.0
      %v1826 = vadd.f32 %v1824, %v1825
      %v1827 = vsel %vm1636, %v842, 0.0
      %v1828 = vadd.f32 %v1826, %v1827
      %v1829 = vsel %vm1636, %v908, 0.0
      %v1830 = vadd.f32 %v1828, %v1829
      %v1831 = vsel %vm1636, %v974, 0.0
      %v1832 = vadd.f32 %v1830, %v1831
      %v1833 = vsel %vm1636, %v1040, 0.0
      %v1834 = vadd.f32 %v1832, %v1833
      %v1835 = vsel %vm1636, %v1106, 0.0
      %v1836 = vadd.f32 %v1834, %v1835
      %v1837 = vsel %vm1636, %v1172, 0.0
      %v1838 = vadd.f32 %v1836, %v1837
      %v1839 = vsel %vm1636, %v1238, 0.0
      %v1840 = vadd.f32 %v1838, %v1839
      %v1841 = vsel %vm1636, %v1304, 0.0
      %v1842 = vadd.f32 %v1840, %v1841
      %v1843 = vsel %vm1636, %v1370, 0.0
      %v1844 = vadd.f32 %v1842, %v1843
      %v1845 = vsel %vm1636, %v1436, 0.0
      %v1846 = vadd.f32 %v1844, %v1845
      %v1847 = vsel %vm1636, %v1502, 0.0
      %v1848 = vadd.f32 %v1846, %v1847
      %v1849 = vsel %vm1636, %v1568, 0.0
      %v1850 = vadd.f32 %v1848, %v1849
      %v1851 = vsel %vm1636, %v1634, 0.0
      %v1852 = vadd.f32 %v1850, %v1851
      %v1853 = vrot.slane %v1852, 4
      %v1854 = vadd.f32 %v1852, %v1853
      %v1855 = vrot.slane %v1854, 2
      %v1856 = vadd.f32 %v1854, %v1855
      %v1857 = vrot.slane %v1856, 1
      %v1858 = vadd.f32 %v1856, %v1857
      %v1859 = vsel %vm1636, %v641, 0.0
      %v1860 = vsel %vm1636, %v707, 0.0
      %v1861 = vadd.f32 %v1859, %v1860
      %v1862 = vsel %vm1636, %v773, 0.0
      %v1863 = vadd.f32 %v1861, %v1862
      %v1864 = vsel %vm1636, %v839, 0.0
      %v1865 = vadd.f32 %v1863, %v1864
      %v1866 = vsel %vm1636, %v905, 0.0
      %v1867 = vadd.f32 %v1865, %v1866
      %v1868 = vsel %vm1636, %v971, 0.0
      %v1869 = vadd.f32 %v1867, %v1868
      %v1870 = vsel %vm1636, %v1037, 0.0
      %v1871 = vadd.f32 %v1869, %v1870
      %v1872 = vsel %vm1636, %v1103, 0.0
      %v1873 = vadd.f32 %v1871, %v1872
      %v1874 = vsel %vm1636, %v1169, 0.0
      %v1875 = vadd.f32 %v1873, %v1874
      %v1876 = vsel %vm1636, %v1235, 0.0
      %v1877 = vadd.f32 %v1875, %v1876
      %v1878 = vsel %vm1636, %v1301, 0.0
      %v1879 = vadd.f32 %v1877, %v1878
      %v1880 = vsel %vm1636, %v1367, 0.0
      %v1881 = vadd.f32 %v1879, %v1880
      %v1882 = vsel %vm1636, %v1433, 0.0
      %v1883 = vadd.f32 %v1881, %v1882
      %v1884 = vsel %vm1636, %v1499, 0.0
      %v1885 = vadd.f32 %v1883, %v1884
      %v1886 = vsel %vm1636, %v1565, 0.0
      %v1887 = vadd.f32 %v1885, %v1886
      %v1888 = vsel %vm1636, %v1631, 0.0
      %v1889 = vadd.f32 %v1887, %v1888
      %v1890 = vrot.slane %v1889, 4
      %v1891 = vadd.f32 %v1889, %v1890
      %v1892 = vrot.slane %v1891, 2
      %v1893 = vadd.f32 %v1891, %v1892
      %v1894 = vrot.slane %v1893, 1
      %v1895 = vadd.f32 %v1893, %v1894
      %v1896 = vsel %vm1636, %v645, 0.0
      %v1897 = vsel %vm1636, %v711, 0.0
      %v1898 = vadd.f32 %v1896, %v1897
      %v1899 = vsel %vm1636, %v777, 0.0
      %v1900 = vadd.f32 %v1898, %v1899
      %v1901 = vsel %vm1636, %v843, 0.0
      %v1902 = vadd.f32 %v1900, %v1901
      %v1903 = vsel %vm1636, %v909, 0.0
      %v1904 = vadd.f32 %v1902, %v1903
      %v1905 = vsel %vm1636, %v975, 0.0
      %v1906 = vadd.f32 %v1904, %v1905
      %v1907 = vsel %vm1636, %v1041, 0.0
      %v1908 = vadd.f32 %v1906, %v1907
      %v1909 = vsel %vm1636, %v1107, 0.0
      %v1910 = vadd.f32 %v1908, %v1909
      %v1911 = vsel %vm1636, %v1173, 0.0
      %v1912 = vadd.f32 %v1910, %v1911
      %v1913 = vsel %vm1636, %v1239, 0.0
      %v1914 = vadd.f32 %v1912, %v1913
      %v1915 = vsel %vm1636, %v1305, 0.0
      %v1916 = vadd.f32 %v1914, %v1915
      %v1917 = vsel %vm1636, %v1371, 0.0
      %v1918 = vadd.f32 %v1916, %v1917
      %v1919 = vsel %vm1636, %v1437, 0.0
      %v1920 = vadd.f32 %v1918, %v1919
      %v1921 = vsel %vm1636, %v1503, 0.0
      %v1922 = vadd.f32 %v1920, %v1921
      %v1923 = vsel %vm1636, %v1569, 0.0
      %v1924 = vadd.f32 %v1922, %v1923
      %v1925 = vsel %vm1636, %v1635, 0.0
      %v1926 = vadd.f32 %v1924, %v1925
      %v1927 = vrot.slane %v1926, 4
      %v1928 = vadd.f32 %v1926, %v1927
      %v1929 = vrot.slane %v1928, 2
      %v1930 = vadd.f32 %v1928, %v1929
      %v1931 = vrot.slane %v1930, 1
      %v1932 = vadd.f32 %v1930, %v1931
      %v1933 = vmul.f32 %v1673, 0.5
      %v1934 = vmul.f32 %v1710, 0.5
      %v1935 = vmul.f32 %v1747, 0.5
      %v1936 = vmul.f32 %v1784, 0.5
      %v1937 = vmul.f32 %v1821, 0.5
      %v1938 = vmul.f32 %v1858, 0.5
      %v1939 = vmul.f32 %v1895, 0.5
      %v1940 = vmul.f32 %v1932, 0.5
      %vm1949 = vcmask 1041409
      %v1950 = vsel %vm1949, %v1934, %v1933
      %vm1951 = vcmask 1042434
      %v1952 = vsel %vm1951, %v1935, %v1950
      %vm1953 = vcmask 1043459
      %v1954 = vsel %vm1953, %v1936, %v1952
      %vm1955 = vcmask 1044484
      %v1956 = vsel %vm1955, %v1937, %v1954
      %vm1957 = vcmask 1045509
      %v1958 = vsel %vm1957, %v1938, %v1956
      %vm1959 = vcmask 1046534
      %v1960 = vsel %vm1959, %v1939, %v1958
      %vm1961 = vcmask 1047559
      %v1962 = vsel %vm1961, %v1940, %v1960
      %1964 = vst [vmem:[#allocation8] sm:$0xff] %v1962
    $region29: #{tpu_custom_call.1} parent=1 // pred_fallthru
      _
    // Predicated region
    $region30: #{tpu_custom_call.1} parent=1 // pred_check
      _
    $region31: #{tpu_custom_call.1} parent=1 // pred_check_branch
      %1966 = sbr.rel (0) target = $region33
    $region32: #{tpu_custom_call.1} parent=1 // pred_region
      %s1968 = ssub.s32 128, 128
      %1969 = vsyncadd [#allocation5], %s1968
      %s1971 = sshll.u32 [#allocation8], 4
      %s1972 = int_to_ptr.vmem [resolvable:$true] %s1971
      %1974 = dma.vmem_to_hbm [thread:$0]  %s1972, 128, %s2, [#allocation5]
    $region33: #{tpu_custom_call.1} parent=1 // pred_fallthru
      _
    // Predicated region
    $region34: #{tpu_custom_call.1} parent=1 // pred_check
      _
    $region35: #{tpu_custom_call.1} parent=1 // pred_check_branch
      %1976 = sbr.rel (0) target = $region37
    $region36: #{tpu_custom_call.1} parent=1 // pred_region
      %1977 = dma.done [#allocation5], 128
    $region37: #{tpu_custom_call.1} parent=1 // pred_fallthru
      _
    %1978 = vsyncpa [#allocation4], 1
    %1979 = vsyncpa [#allocation7], 1
    %1980 = vsyncpa [#allocation5], 1

</llo_original>
